<compile_context>
chip_gen: v5e
topology: v5e:2x2
jax: 0.10.0
libtpu: 0.0.40
codegen_flags: <defaults>
</compile_context>

<pallas_src>
import jax
import jax.numpy as jnp
import numpy as np
from jax.experimental import pallas as pl
from jax.experimental.pallas import tpu as pltpu

B = 2      # batch
T = 8      # sequence length
H = 50     # hidden size (fixed by the module)
IN = 1     # input size (fixed by the module)
HP = 128   # hidden padded to one full lane width per gate slot


def _airmodel_kernel(xproj_ref, whh_ref, wlin_ref, blin_ref, y_ref, hs_sc):
    """Whole LSTM recurrence + final Linear in one invocation.

    xproj_ref : (T, B, 4*HP)  precomputed x @ W_ih^T + (b_ih+b_hh); gate g in lanes [g*HP, g*HP+H)
    whh_ref   : (HP, 4*HP)    fused recurrent weights; gate g in lanes [g*HP, g*HP+H)
    wlin_ref  : (1, HP)       Linear(50->1) weight row, valid entries in lanes [0, H)
    blin_ref  : (1, 1)        Linear bias
    y_ref     : (T*B, 1)      output column, time-major (t fast over b)
    hs_sc     : (T*B, HP)     VMEM stash of per-step hidden states for the hoisted Linear
    """
    # h / c carried as values (vregs) across the fully-unrolled recurrence.
    h = jnp.zeros((B, HP), jnp.float32)
    c = jnp.zeros((B, HP), jnp.float32)

    for t in range(T):
        # One fused MXU matmul for all four gates + the precomputed input/bias term.
        gates = xproj_ref[t] + jnp.dot(h, whh_ref[...],
                                       preferred_element_type=jnp.float32)   # (B, 4*HP)

        # PyTorch gate order: i, f, g, o — each in its own 128-lane-aligned slot.
        # sigmoid(x) == 0.5*tanh(0.5*x) + 0.5  (single EUP op per gate).
        i_g = 0.5 * jnp.tanh(0.5 * gates[:, 0 * HP:1 * HP]) + 0.5
        f_g = 0.5 * jnp.tanh(0.5 * gates[:, 1 * HP:2 * HP]) + 0.5
        g_g = jnp.tanh(gates[:, 2 * HP:3 * HP])
        o_g = 0.5 * jnp.tanh(0.5 * gates[:, 3 * HP:4 * HP]) + 0.5

        # Padded lanes stay exactly zero: gates=0 there -> i=f=o=0.5, g=0, c stays 0, h=0.
        c = f_g * c + i_g * g_g
        h = o_g * jnp.tanh(c)
        hs_sc[t * B:(t + 1) * B, :] = h      # single store per step

    # Hoisted Linear(50 -> 1): elementwise multiply by the weight row + lane reduction.
    y_ref[...] = (jnp.sum(hs_sc[...] * wlin_ref[...], axis=-1, keepdims=True)
                  + blin_ref[...])


def pack_params(W_ih, W_hh, b_ih, b_hh, W_lin, b_lin):
    """One-time packing of the module parameters into lane-aligned slabs (runs at init)."""
    bsum = (b_ih + b_hh).astype(jnp.float32)

    # Input projection weights / bias per gate, gate g in lanes [g*HP, g*HP+H).
    wih_packed = jnp.zeros((IN, 4 * HP), jnp.float32)
    bias_packed = jnp.zeros((1, 4 * HP), jnp.float32)
    for g in range(4):
        wih_packed = wih_packed.at[:, g * HP:g * HP + H].set(W_ih[g * H:(g + 1) * H, :].T)
        bias_packed = bias_packed.at[0, g * HP:g * HP + H].set(bsum[g * H:(g + 1) * H])

    # Fused recurrent weights: whh_packed[h_in, g*HP + h_out] = W_hh[g*H + h_out, h_in].
    whh = jnp.transpose(W_hh.reshape(4, H, H), (0, 2, 1))               # (4, H_in, H_out)
    whh = jnp.pad(whh, ((0, 0), (0, HP - H), (0, HP - H)))              # (4, HP, HP)
    whh_packed = jnp.transpose(whh, (1, 0, 2)).reshape(HP, 4 * HP)      # (HP, 4*HP)

    # Final Linear(50 -> 1) as a (1, HP) row + scalar bias.
    wlin_row = jnp.zeros((1, HP), jnp.float32).at[0, :H].set(W_lin[0])
    blin = b_lin.reshape(1, 1).astype(jnp.float32)

    return wih_packed, bias_packed, whh_packed, wlin_row, blin


@jax.jit
def air_model_forward(x, wih_packed, bias_packed, whh_packed, wlin_row, blin):
    """x: (B, T, 1) float32 -> (B, T, 1) float32 (matches PyTorch AirModel.forward)."""
    # Per-call input projection (x-dependent, fused by XLA under jit): (T*B, 4*HP).
    x_tm = jnp.transpose(x, (1, 0, 2)).reshape(T * B, IN)               # time-major, flat
    xproj = (x_tm @ wih_packed + bias_packed).reshape(T, B, 4 * HP)

    # Single kernel invocation; all inputs are tiny and live whole in VMEM (no grid,
    # no per-step DMA). Total resident footprint << 1 MiB on every TPU generation.
    y_col = pl.pallas_call(
        _airmodel_kernel,
        out_shape=jax.ShapeDtypeStruct((T * B, 1), jnp.float32),
        scratch_shapes=[
            pltpu.VMEM((T * B, HP), jnp.float32),   # all hidden states (for hoisted Linear)
        ],
    )(xproj, whh_packed, wlin_row, blin)

    # (T*B, 1) time-major -> (B, T, 1).
    return jnp.transpose(y_col.reshape(T, B, 1), (1, 0, 2))


def _reference_forward(x, W_ih, W_hh, b_ih, b_hh, W_lin, b_lin):
    """Pure-JAX reference mirroring torch.nn.LSTM + Linear semantics."""
    h = jnp.zeros((B, H), jnp.float32)
    c = jnp.zeros((B, H), jnp.float32)
    ys = []
    for t in range(T):
        xt = x[:, t, :]                                            # (B, 1)
        gates = xt @ W_ih.T + h @ W_hh.T + b_ih + b_hh             # (B, 4H)
        i = jax.nn.sigmoid(gates[:, 0 * H:1 * H])
        f = jax.nn.sigmoid(gates[:, 1 * H:2 * H])
        g = jnp.tanh(gates[:, 2 * H:3 * H])
        o = jax.nn.sigmoid(gates[:, 3 * H:4 * H])
        c = f * c + i * g
        h = o * jnp.tanh(c)
        ys.append(h @ W_lin.T + b_lin)
    return jnp.stack(ys, axis=1)                                   # (B, T, 1)


if __name__ == "__main__":
    key = jax.random.PRNGKey(0)
    ks = jax.random.split(key, 8)
    bound = 1.0 / np.sqrt(H)  # PyTorch default uniform init bound for LSTM/Linear

    # Parameter shapes exactly as in nn.LSTM(1, 50) / nn.Linear(50, 1)
    W_ih = jax.random.uniform(ks[0], (4 * H, IN), jnp.float32, -bound, bound)
    W_hh = jax.random.uniform(ks[1], (4 * H, H), jnp.float32, -bound, bound)
    b_ih = jax.random.uniform(ks[2], (4 * H,), jnp.float32, -bound, bound)
    b_hh = jax.random.uniform(ks[3], (4 * H,), jnp.float32, -bound, bound)
    W_lin = jax.random.uniform(ks[4], (1, H), jnp.float32, -bound, bound)
    b_lin = jax.random.uniform(ks[5], (1,), jnp.float32, -bound, bound)

    x = jax.random.normal(ks[6], (B, T, IN), jnp.float32)

    # One-time packing (hoisted off the per-call path).
    packed = pack_params(W_ih, W_hh, b_ih, b_hh, W_lin, b_lin)

    y = air_model_forward(x, *packed)
    y = jax.block_until_ready(y)

    y_ref = _reference_forward(x, W_ih, W_hh, b_ih, b_hh, W_lin, b_lin)
    np.testing.assert_allclose(np.asarray(y), np.asarray(y_ref), rtol=1e-4, atol=1e-4)

    assert y.shape == (B, T, 1)
    print("KERNEL_OK")
</pallas_src>

<mosaic_0001>
module attributes {stable_mosaic.version = 11 : i64} {
  func.func @_airmodel_kernel(%arg0: memref<8x2x512xf32, #tpu.memory_space<vmem>>, %arg1: memref<128x512xf32, #tpu.memory_space<vmem>>, %arg2: memref<1x128xf32, #tpu.memory_space<vmem>>, %arg3: memref<1x1xf32, #tpu.memory_space<vmem>>, %arg4: memref<16x1xf32, #tpu.memory_space<vmem>>, %arg5: memref<16x128xf32, #tpu.memory_space<vmem>>) attributes {dimension_semantics = [], scalar_prefetch = 0 : i64, scratch_operands = 1 : i64, tpu.core_type = #tpu.core_type<tc>} {
    %cst = arith.constant 0.000000e+00 : f32
    %0 = vector.broadcast %cst : f32 to vector<2x128xf32>
    %cst_0 = arith.constant 0.000000e+00 : f32
    %1 = vector.broadcast %cst_0 : f32 to vector<2x128xf32>
    %c0 = arith.constant 0 : index
    %c0_1 = arith.constant 0 : index
    %c0_2 = arith.constant 0 : index
    %2 = vector.load %arg0[%c0, %c0_1, %c0_2] : memref<8x2x512xf32, #tpu.memory_space<vmem>>, vector<1x2x512xf32>
    %3 = vector.shape_cast %2 : vector<1x2x512xf32> to vector<2x512xf32>
    %c0_3 = arith.constant 0 : index
    %c0_4 = arith.constant 0 : index
    %4 = vector.load %arg1[%c0_3, %c0_4] : memref<128x512xf32, #tpu.memory_space<vmem>>, vector<128x512xf32>
    %cst_5 = arith.constant dense<0.000000e+00> : vector<2x512xf32>
    %5 = tpu.matmul %0, %4, %cst_5 {dimension_numbers = #tpu.dot_dimension_numbers<[1], [0], [0], [1], [0, 0, 1, 1], [], []>} : vector<2x128xf32>, vector<128x512xf32>, vector<2x512xf32> -> vector<2x512xf32>
    %6 = arith.addf %3, %5 : vector<2x512xf32>
    %7 = vector.extract_strided_slice %6 {offsets = [0, 0], sizes = [2, 128], strides = [1, 1]} : vector<2x512xf32> to vector<2x128xf32>
    %cst_6 = arith.constant 5.000000e-01 : f32
    %8 = vector.broadcast %cst_6 : f32 to vector<2x128xf32>
    %9 = arith.mulf %8, %7 : vector<2x128xf32>
    %10 = math.tanh %9 : vector<2x128xf32>
    %cst_7 = arith.constant 5.000000e-01 : f32
    %11 = vector.broadcast %cst_7 : f32 to vector<2x128xf32>
    %12 = arith.mulf %11, %10 : vector<2x128xf32>
    %cst_8 = arith.constant 5.000000e-01 : f32
    %13 = vector.broadcast %cst_8 : f32 to vector<2x128xf32>
    %14 = arith.addf %12, %13 : vector<2x128xf32>
    %15 = vector.extract_strided_slice %6 {offsets = [0, 128], sizes = [2, 128], strides = [1, 1]} : vector<2x512xf32> to vector<2x128xf32>
    %cst_9 = arith.constant 5.000000e-01 : f32
    %16 = vector.broadcast %cst_9 : f32 to vector<2x128xf32>
    %17 = arith.mulf %16, %15 : vector<2x128xf32>
    %18 = math.tanh %17 : vector<2x128xf32>
    %cst_10 = arith.constant 5.000000e-01 : f32
    %19 = vector.broadcast %cst_10 : f32 to vector<2x128xf32>
    %20 = arith.mulf %19, %18 : vector<2x128xf32>
    %cst_11 = arith.constant 5.000000e-01 : f32
    %21 = vector.broadcast %cst_11 : f32 to vector<2x128xf32>
    %22 = arith.addf %20, %21 : vector<2x128xf32>
    %23 = vector.extract_strided_slice %6 {offsets = [0, 256], sizes = [2, 128], strides = [1, 1]} : vector<2x512xf32> to vector<2x128xf32>
    %24 = math.tanh %23 : vector<2x128xf32>
    %25 = vector.extract_strided_slice %6 {offsets = [0, 384], sizes = [2, 128], strides = [1, 1]} : vector<2x512xf32> to vector<2x128xf32>
    %cst_12 = arith.constant 5.000000e-01 : f32
    %26 = vector.broadcast %cst_12 : f32 to vector<2x128xf32>
    %27 = arith.mulf %26, %25 : vector<2x128xf32>
    %28 = math.tanh %27 : vector<2x128xf32>
    %cst_13 = arith.constant 5.000000e-01 : f32
    %29 = vector.broadcast %cst_13 : f32 to vector<2x128xf32>
    %30 = arith.mulf %29, %28 : vector<2x128xf32>
    %cst_14 = arith.constant 5.000000e-01 : f32
    %31 = vector.broadcast %cst_14 : f32 to vector<2x128xf32>
    %32 = arith.addf %30, %31 : vector<2x128xf32>
    %33 = arith.mulf %22, %1 : vector<2x128xf32>
    %34 = arith.mulf %14, %24 : vector<2x128xf32>
    %35 = arith.addf %33, %34 : vector<2x128xf32>
    %36 = math.tanh %35 : vector<2x128xf32>
    %37 = arith.mulf %32, %36 : vector<2x128xf32>
    %c0_15 = arith.constant 0 : index
    %c0_16 = arith.constant 0 : index
    %38 = vector.load %arg5[%c0_15, %c0_16] : memref<16x128xf32, #tpu.memory_space<vmem>>, vector<2x128xf32>
    tpu.vector_store %arg5[%c0_15, %c0_16], %37 {strides = array<i32>} : memref<16x128xf32, #tpu.memory_space<vmem>>, vector<2x128xf32>,
    %c1 = arith.constant 1 : index
    %c0_17 = arith.constant 0 : index
    %c0_18 = arith.constant 0 : index
    %39 = vector.load %arg0[%c1, %c0_17, %c0_18] : memref<8x2x512xf32, #tpu.memory_space<vmem>>, vector<1x2x512xf32>
    %40 = vector.shape_cast %39 : vector<1x2x512xf32> to vector<2x512xf32>
    %c0_19 = arith.constant 0 : index
    %c0_20 = arith.constant 0 : index
    %41 = vector.load %arg1[%c0_19, %c0_20] : memref<128x512xf32, #tpu.memory_space<vmem>>, vector<128x512xf32>
    %cst_21 = arith.constant dense<0.000000e+00> : vector<2x512xf32>
    %42 = tpu.matmul %37, %41, %cst_21 {dimension_numbers = #tpu.dot_dimension_numbers<[1], [0], [0], [1], [0, 0, 1, 1], [], []>} : vector<2x128xf32>, vector<128x512xf32>, vector<2x512xf32> -> vector<2x512xf32>
    %43 = arith.addf %40, %42 : vector<2x512xf32>
    %44 = vector.extract_strided_slice %43 {offsets = [0, 0], sizes = [2, 128], strides = [1, 1]} : vector<2x512xf32> to vector<2x128xf32>
    %cst_22 = arith.constant 5.000000e-01 : f32
    %45 = vector.broadcast %cst_22 : f32 to vector<2x128xf32>
    %46 = arith.mulf %45, %44 : vector<2x128xf32>
    %47 = math.tanh %46 : vector<2x128xf32>
    %cst_23 = arith.constant 5.000000e-01 : f32
    %48 = vector.broadcast %cst_23 : f32 to vector<2x128xf32>
    %49 = arith.mulf %48, %47 : vector<2x128xf32>
    %cst_24 = arith.constant 5.000000e-01 : f32
    %50 = vector.broadcast %cst_24 : f32 to vector<2x128xf32>
    %51 = arith.addf %49, %50 : vector<2x128xf32>
    %52 = vector.extract_strided_slice %43 {offsets = [0, 128], sizes = [2, 128], strides = [1, 1]} : vector<2x512xf32> to vector<2x128xf32>
    %cst_25 = arith.constant 5.000000e-01 : f32
    %53 = vector.broadcast %cst_25 : f32 to vector<2x128xf32>
    %54 = arith.mulf %53, %52 : vector<2x128xf32>
    %55 = math.tanh %54 : vector<2x128xf32>
    %cst_26 = arith.constant 5.000000e-01 : f32
    %56 = vector.broadcast %cst_26 : f32 to vector<2x128xf32>
    %57 = arith.mulf %56, %55 : vector<2x128xf32>
    %cst_27 = arith.constant 5.000000e-01 : f32
    %58 = vector.broadcast %cst_27 : f32 to vector<2x128xf32>
    %59 = arith.addf %57, %58 : vector<2x128xf32>
    %60 = vector.extract_strided_slice %43 {offsets = [0, 256], sizes = [2, 128], strides = [1, 1]} : vector<2x512xf32> to vector<2x128xf32>
    %61 = math.tanh %60 : vector<2x128xf32>
    %62 = vector.extract_strided_slice %43 {offsets = [0, 384], sizes = [2, 128], strides = [1, 1]} : vector<2x512xf32> to vector<2x128xf32>
    %cst_28 = arith.constant 5.000000e-01 : f32
    %63 = vector.broadcast %cst_28 : f32 to vector<2x128xf32>
    %64 = arith.mulf %63, %62 : vector<2x128xf32>
    %65 = math.tanh %64 : vector<2x128xf32>
    %cst_29 = arith.constant 5.000000e-01 : f32
    %66 = vector.broadcast %cst_29 : f32 to vector<2x128xf32>
    %67 = arith.mulf %66, %65 : vector<2x128xf32>
    %cst_30 = arith.constant 5.000000e-01 : f32
    %68 = vector.broadcast %cst_30 : f32 to vector<2x128xf32>
    %69 = arith.addf %67, %68 : vector<2x128xf32>
    %70 = arith.mulf %59, %35 : vector<2x128xf32>
    %71 = arith.mulf %51, %61 : vector<2x128xf32>
    %72 = arith.addf %70, %71 : vector<2x128xf32>
    %73 = math.tanh %72 : vector<2x128xf32>
    %74 = arith.mulf %69, %73 : vector<2x128xf32>
    %c2 = arith.constant 2 : index
    %c0_31 = arith.constant 0 : index
    %75 = vector.load %arg5[%c2, %c0_31] : memref<16x128xf32, #tpu.memory_space<vmem>>, vector<2x128xf32>
    tpu.vector_store %arg5[%c2, %c0_31], %74 {strides = array<i32>} : memref<16x128xf32, #tpu.memory_space<vmem>>, vector<2x128xf32>,
    %c2_32 = arith.constant 2 : index
    %c0_33 = arith.constant 0 : index
    %c0_34 = arith.constant 0 : index
    %76 = vector.load %arg0[%c2_32, %c0_33, %c0_34] : memref<8x2x512xf32, #tpu.memory_space<vmem>>, vector<1x2x512xf32>
    %77 = vector.shape_cast %76 : vector<1x2x512xf32> to vector<2x512xf32>
    %c0_35 = arith.constant 0 : index
    %c0_36 = arith.constant 0 : index
    %78 = vector.load %arg1[%c0_35, %c0_36] : memref<128x512xf32, #tpu.memory_space<vmem>>, vector<128x512xf32>
    %cst_37 = arith.constant dense<0.000000e+00> : vector<2x512xf32>
    %79 = tpu.matmul %74, %78, %cst_37 {dimension_numbers = #tpu.dot_dimension_numbers<[1], [0], [0], [1], [0, 0, 1, 1], [], []>} : vector<2x128xf32>, vector<128x512xf32>, vector<2x512xf32> -> vector<2x512xf32>
    %80 = arith.addf %77, %79 : vector<2x512xf32>
    %81 = vector.extract_strided_slice %80 {offsets = [0, 0], sizes = [2, 128], strides = [1, 1]} : vector<2x512xf32> to vector<2x128xf32>
    %cst_38 = arith.constant 5.000000e-01 : f32
    %82 = vector.broadcast %cst_38 : f32 to vector<2x128xf32>
    %83 = arith.mulf %82, %81 : vector<2x128xf32>
    %84 = math.tanh %83 : vector<2x128xf32>
    %cst_39 = arith.constant 5.000000e-01 : f32
    %85 = vector.broadcast %cst_39 : f32 to vector<2x128xf32>
    %86 = arith.mulf %85, %84 : vector<2x128xf32>
    %cst_40 = arith.constant 5.000000e-01 : f32
    %87 = vector.broadcast %cst_40 : f32 to vector<2x128xf32>
    %88 = arith.addf %86, %87 : vector<2x128xf32>
    %89 = vector.extract_strided_slice %80 {offsets = [0, 128], sizes = [2, 128], strides = [1, 1]} : vector<2x512xf32> to vector<2x128xf32>
    %cst_41 = arith.constant 5.000000e-01 : f32
    %90 = vector.broadcast %cst_41 : f32 to vector<2x128xf32>
    %91 = arith.mulf %90, %89 : vector<2x128xf32>
    %92 = math.tanh %91 : vector<2x128xf32>
    %cst_42 = arith.constant 5.000000e-01 : f32
    %93 = vector.broadcast %cst_42 : f32 to vector<2x128xf32>
    %94 = arith.mulf %93, %92 : vector<2x128xf32>
    %cst_43 = arith.constant 5.000000e-01 : f32
    %95 = vector.broadcast %cst_43 : f32 to vector<2x128xf32>
    %96 = arith.addf %94, %95 : vector<2x128xf32>
    %97 = vector.extract_strided_slice %80 {offsets = [0, 256], sizes = [2, 128], strides = [1, 1]} : vector<2x512xf32> to vector<2x128xf32>
    %98 = math.tanh %97 : vector<2x128xf32>
    %99 = vector.extract_strided_slice %80 {offsets = [0, 384], sizes = [2, 128], strides = [1, 1]} : vector<2x512xf32> to vector<2x128xf32>
    %cst_44 = arith.constant 5.000000e-01 : f32
    %100 = vector.broadcast %cst_44 : f32 to vector<2x128xf32>
    %101 = arith.mulf %100, %99 : vector<2x128xf32>
    %102 = math.tanh %101 : vector<2x128xf32>
    %cst_45 = arith.constant 5.000000e-01 : f32
    %103 = vector.broadcast %cst_45 : f32 to vector<2x128xf32>
    %104 = arith.mulf %103, %102 : vector<2x128xf32>
    %cst_46 = arith.constant 5.000000e-01 : f32
    %105 = vector.broadcast %cst_46 : f32 to vector<2x128xf32>
    %106 = arith.addf %104, %105 : vector<2x128xf32>
    %107 = arith.mulf %96, %72 : vector<2x128xf32>
    %108 = arith.mulf %88, %98 : vector<2x128xf32>
    %109 = arith.addf %107, %108 : vector<2x128xf32>
    %110 = math.tanh %109 : vector<2x128xf32>
    %111 = arith.mulf %106, %110 : vector<2x128xf32>
    %c4 = arith.constant 4 : index
    %c0_47 = arith.constant 0 : index
    %112 = vector.load %arg5[%c4, %c0_47] : memref<16x128xf32, #tpu.memory_space<vmem>>, vector<2x128xf32>
    tpu.vector_store %arg5[%c4, %c0_47], %111 {strides = array<i32>} : memref<16x128xf32, #tpu.memory_space<vmem>>, vector<2x128xf32>,
    %c3 = arith.constant 3 : index
    %c0_48 = arith.constant 0 : index
    %c0_49 = arith.constant 0 : index
    %113 = vector.load %arg0[%c3, %c0_48, %c0_49] : memref<8x2x512xf32, #tpu.memory_space<vmem>>, vector<1x2x512xf32>
    %114 = vector.shape_cast %113 : vector<1x2x512xf32> to vector<2x512xf32>
    %c0_50 = arith.constant 0 : index
    %c0_51 = arith.constant 0 : index
    %115 = vector.load %arg1[%c0_50, %c0_51] : memref<128x512xf32, #tpu.memory_space<vmem>>, vector<128x512xf32>
    %cst_52 = arith.constant dense<0.000000e+00> : vector<2x512xf32>
    %116 = tpu.matmul %111, %115, %cst_52 {dimension_numbers = #tpu.dot_dimension_numbers<[1], [0], [0], [1], [0, 0, 1, 1], [], []>} : vector<2x128xf32>, vector<128x512xf32>, vector<2x512xf32> -> vector<2x512xf32>
    %117 = arith.addf %114, %116 : vector<2x512xf32>
    %118 = vector.extract_strided_slice %117 {offsets = [0, 0], sizes = [2, 128], strides = [1, 1]} : vector<2x512xf32> to vector<2x128xf32>
    %cst_53 = arith.constant 5.000000e-01 : f32
    %119 = vector.broadcast %cst_53 : f32 to vector<2x128xf32>
    %120 = arith.mulf %119, %118 : vector<2x128xf32>
    %121 = math.tanh %120 : vector<2x128xf32>
    %cst_54 = arith.constant 5.000000e-01 : f32
    %122 = vector.broadcast %cst_54 : f32 to vector<2x128xf32>
    %123 = arith.mulf %122, %121 : vector<2x128xf32>
    %cst_55 = arith.constant 5.000000e-01 : f32
    %124 = vector.broadcast %cst_55 : f32 to vector<2x128xf32>
    %125 = arith.addf %123, %124 : vector<2x128xf32>
    %126 = vector.extract_strided_slice %117 {offsets = [0, 128], sizes = [2, 128], strides = [1, 1]} : vector<2x512xf32> to vector<2x128xf32>
    %cst_56 = arith.constant 5.000000e-01 : f32
    %127 = vector.broadcast %cst_56 : f32 to vector<2x128xf32>
    %128 = arith.mulf %127, %126 : vector<2x128xf32>
    %129 = math.tanh %128 : vector<2x128xf32>
    %cst_57 = arith.constant 5.000000e-01 : f32
    %130 = vector.broadcast %cst_57 : f32 to vector<2x128xf32>
    %131 = arith.mulf %130, %129 : vector<2x128xf32>
    %cst_58 = arith.constant 5.000000e-01 : f32
    %132 = vector.broadcast %cst_58 : f32 to vector<2x128xf32>
    %133 = arith.addf %131, %132 : vector<2x128xf32>
    %134 = vector.extract_strided_slice %117 {offsets = [0, 256], sizes = [2, 128], strides = [1, 1]} : vector<2x512xf32> to vector<2x128xf32>
    %135 = math.tanh %134 : vector<2x128xf32>
    %136 = vector.extract_strided_slice %117 {offsets = [0, 384], sizes = [2, 128], strides = [1, 1]} : vector<2x512xf32> to vector<2x128xf32>
    %cst_59 = arith.constant 5.000000e-01 : f32
    %137 = vector.broadcast %cst_59 : f32 to vector<2x128xf32>
    %138 = arith.mulf %137, %136 : vector<2x128xf32>
    %139 = math.tanh %138 : vector<2x128xf32>
    %cst_60 = arith.constant 5.000000e-01 : f32
    %140 = vector.broadcast %cst_60 : f32 to vector<2x128xf32>
    %141 = arith.mulf %140, %139 : vector<2x128xf32>
    %cst_61 = arith.constant 5.000000e-01 : f32
    %142 = vector.broadcast %cst_61 : f32 to vector<2x128xf32>
    %143 = arith.addf %141, %142 : vector<2x128xf32>
    %144 = arith.mulf %133, %109 : vector<2x128xf32>
    %145 = arith.mulf %125, %135 : vector<2x128xf32>
    %146 = arith.addf %144, %145 : vector<2x128xf32>
    %147 = math.tanh %146 : vector<2x128xf32>
    %148 = arith.mulf %143, %147 : vector<2x128xf32>
    %c6 = arith.constant 6 : index
    %c0_62 = arith.constant 0 : index
    %149 = vector.load %arg5[%c6, %c0_62] : memref<16x128xf32, #tpu.memory_space<vmem>>, vector<2x128xf32>
    tpu.vector_store %arg5[%c6, %c0_62], %148 {strides = array<i32>} : memref<16x128xf32, #tpu.memory_space<vmem>>, vector<2x128xf32>,
    %c4_63 = arith.constant 4 : index
    %c0_64 = arith.constant 0 : index
    %c0_65 = arith.constant 0 : index
    %150 = vector.load %arg0[%c4_63, %c0_64, %c0_65] : memref<8x2x512xf32, #tpu.memory_space<vmem>>, vector<1x2x512xf32>
    %151 = vector.shape_cast %150 : vector<1x2x512xf32> to vector<2x512xf32>
    %c0_66 = arith.constant 0 : index
    %c0_67 = arith.constant 0 : index
    %152 = vector.load %arg1[%c0_66, %c0_67] : memref<128x512xf32, #tpu.memory_space<vmem>>, vector<128x512xf32>
    %cst_68 = arith.constant dense<0.000000e+00> : vector<2x512xf32>
    %153 = tpu.matmul %148, %152, %cst_68 {dimension_numbers = #tpu.dot_dimension_numbers<[1], [0], [0], [1], [0, 0, 1, 1], [], []>} : vector<2x128xf32>, vector<128x512xf32>, vector<2x512xf32> -> vector<2x512xf32>
    %154 = arith.addf %151, %153 : vector<2x512xf32>
    %155 = vector.extract_strided_slice %154 {offsets = [0, 0], sizes = [2, 128], strides = [1, 1]} : vector<2x512xf32> to vector<2x128xf32>
    %cst_69 = arith.constant 5.000000e-01 : f32
    %156 = vector.broadcast %cst_69 : f32 to vector<2x128xf32>
    %157 = arith.mulf %156, %155 : vector<2x128xf32>
    %158 = math.tanh %157 : vector<2x128xf32>
    %cst_70 = arith.constant 5.000000e-01 : f32
    %159 = vector.broadcast %cst_70 : f32 to vector<2x128xf32>
    %160 = arith.mulf %159, %158 : vector<2x128xf32>
    %cst_71 = arith.constant 5.000000e-01 : f32
    %161 = vector.broadcast %cst_71 : f32 to vector<2x128xf32>
    %162 = arith.addf %160, %161 : vector<2x128xf32>
    %163 = vector.extract_strided_slice %154 {offsets = [0, 128], sizes = [2, 128], strides = [1, 1]} : vector<2x512xf32> to vector<2x128xf32>
    %cst_72 = arith.constant 5.000000e-01 : f32
    %164 = vector.broadcast %cst_72 : f32 to vector<2x128xf32>
    %165 = arith.mulf %164, %163 : vector<2x128xf32>
    %166 = math.tanh %165 : vector<2x128xf32>
    %cst_73 = arith.constant 5.000000e-01 : f32
    %167 = vector.broadcast %cst_73 : f32 to vector<2x128xf32>
    %168 = arith.mulf %167, %166 : vector<2x128xf32>
    %cst_74 = arith.constant 5.000000e-01 : f32
    %169 = vector.broadcast %cst_74 : f32 to vector<2x128xf32>
    %170 = arith.addf %168, %169 : vector<2x128xf32>
    %171 = vector.extract_strided_slice %154 {offsets = [0, 256], sizes = [2, 128], strides = [1, 1]} : vector<2x512xf32> to vector<2x128xf32>
    %172 = math.tanh %171 : vector<2x128xf32>
    %173 = vector.extract_strided_slice %154 {offsets = [0, 384], sizes = [2, 128], strides = [1, 1]} : vector<2x512xf32> to vector<2x128xf32>
    %cst_75 = arith.constant 5.000000e-01 : f32
    %174 = vector.broadcast %cst_75 : f32 to vector<2x128xf32>
    %175 = arith.mulf %174, %173 : vector<2x128xf32>
    %176 = math.tanh %175 : vector<2x128xf32>
    %cst_76 = arith.constant 5.000000e-01 : f32
    %177 = vector.broadcast %cst_76 : f32 to vector<2x128xf32>
    %178 = arith.mulf %177, %176 : vector<2x128xf32>
    %cst_77 = arith.constant 5.000000e-01 : f32
    %179 = vector.broadcast %cst_77 : f32 to vector<2x128xf32>
    %180 = arith.addf %178, %179 : vector<2x128xf32>
    %181 = arith.mulf %170, %146 : vector<2x128xf32>
    %182 = arith.mulf %162, %172 : vector<2x128xf32>
    %183 = arith.addf %181, %182 : vector<2x128xf32>
    %184 = math.tanh %183 : vector<2x128xf32>
    %185 = arith.mulf %180, %184 : vector<2x128xf32>
    %c8 = arith.constant 8 : index
    %c0_78 = arith.constant 0 : index
    %186 = vector.load %arg5[%c8, %c0_78] : memref<16x128xf32, #tpu.memory_space<vmem>>, vector<2x128xf32>
    tpu.vector_store %arg5[%c8, %c0_78], %185 {strides = array<i32>} : memref<16x128xf32, #tpu.memory_space<vmem>>, vector<2x128xf32>,
    %c5 = arith.constant 5 : index
    %c0_79 = arith.constant 0 : index
    %c0_80 = arith.constant 0 : index
    %187 = vector.load %arg0[%c5, %c0_79, %c0_80] : memref<8x2x512xf32, #tpu.memory_space<vmem>>, vector<1x2x512xf32>
    %188 = vector.shape_cast %187 : vector<1x2x512xf32> to vector<2x512xf32>
    %c0_81 = arith.constant 0 : index
    %c0_82 = arith.constant 0 : index
    %189 = vector.load %arg1[%c0_81, %c0_82] : memref<128x512xf32, #tpu.memory_space<vmem>>, vector<128x512xf32>
    %cst_83 = arith.constant dense<0.000000e+00> : vector<2x512xf32>
    %190 = tpu.matmul %185, %189, %cst_83 {dimension_numbers = #tpu.dot_dimension_numbers<[1], [0], [0], [1], [0, 0, 1, 1], [], []>} : vector<2x128xf32>, vector<128x512xf32>, vector<2x512xf32> -> vector<2x512xf32>
    %191 = arith.addf %188, %190 : vector<2x512xf32>
    %192 = vector.extract_strided_slice %191 {offsets = [0, 0], sizes = [2, 128], strides = [1, 1]} : vector<2x512xf32> to vector<2x128xf32>
    %cst_84 = arith.constant 5.000000e-01 : f32
    %193 = vector.broadcast %cst_84 : f32 to vector<2x128xf32>
    %194 = arith.mulf %193, %192 : vector<2x128xf32>
    %195 = math.tanh %194 : vector<2x128xf32>
    %cst_85 = arith.constant 5.000000e-01 : f32
    %196 = vector.broadcast %cst_85 : f32 to vector<2x128xf32>
    %197 = arith.mulf %196, %195 : vector<2x128xf32>
    %cst_86 = arith.constant 5.000000e-01 : f32
    %198 = vector.broadcast %cst_86 : f32 to vector<2x128xf32>
    %199 = arith.addf %197, %198 : vector<2x128xf32>
    %200 = vector.extract_strided_slice %191 {offsets = [0, 128], sizes = [2, 128], strides = [1, 1]} : vector<2x512xf32> to vector<2x128xf32>
    %cst_87 = arith.constant 5.000000e-01 : f32
    %201 = vector.broadcast %cst_87 : f32 to vector<2x128xf32>
    %202 = arith.mulf %201, %200 : vector<2x128xf32>
    %203 = math.tanh %202 : vector<2x128xf32>
    %cst_88 = arith.constant 5.000000e-01 : f32
    %204 = vector.broadcast %cst_88 : f32 to vector<2x128xf32>
    %205 = arith.mulf %204, %203 : vector<2x128xf32>
    %cst_89 = arith.constant 5.000000e-01 : f32
    %206 = vector.broadcast %cst_89 : f32 to vector<2x128xf32>
    %207 = arith.addf %205, %206 : vector<2x128xf32>
    %208 = vector.extract_strided_slice %191 {offsets = [0, 256], sizes = [2, 128], strides = [1, 1]} : vector<2x512xf32> to vector<2x128xf32>
    %209 = math.tanh %208 : vector<2x128xf32>
    %210 = vector.extract_strided_slice %191 {offsets = [0, 384], sizes = [2, 128], strides = [1, 1]} : vector<2x512xf32> to vector<2x128xf32>
    %cst_90 = arith.constant 5.000000e-01 : f32
    %211 = vector.broadcast %cst_90 : f32 to vector<2x128xf32>
    %212 = arith.mulf %211, %210 : vector<2x128xf32>
    %213 = math.tanh %212 : vector<2x128xf32>
    %cst_91 = arith.constant 5.000000e-01 : f32
    %214 = vector.broadcast %cst_91 : f32 to vector<2x128xf32>
    %215 = arith.mulf %214, %213 : vector<2x128xf32>
    %cst_92 = arith.constant 5.000000e-01 : f32
    %216 = vector.broadcast %cst_92 : f32 to vector<2x128xf32>
    %217 = arith.addf %215, %216 : vector<2x128xf32>
    %218 = arith.mulf %207, %183 : vector<2x128xf32>
    %219 = arith.mulf %199, %209 : vector<2x128xf32>
    %220 = arith.addf %218, %219 : vector<2x128xf32>
    %221 = math.tanh %220 : vector<2x128xf32>
    %222 = arith.mulf %217, %221 : vector<2x128xf32>
    %c10 = arith.constant 10 : index
    %c0_93 = arith.constant 0 : index
    %223 = vector.load %arg5[%c10, %c0_93] : memref<16x128xf32, #tpu.memory_space<vmem>>, vector<2x128xf32>
    tpu.vector_store %arg5[%c10, %c0_93], %222 {strides = array<i32>} : memref<16x128xf32, #tpu.memory_space<vmem>>, vector<2x128xf32>,
    %c6_94 = arith.constant 6 : index
    %c0_95 = arith.constant 0 : index
    %c0_96 = arith.constant 0 : index
    %224 = vector.load %arg0[%c6_94, %c0_95, %c0_96] : memref<8x2x512xf32, #tpu.memory_space<vmem>>, vector<1x2x512xf32>
    %225 = vector.shape_cast %224 : vector<1x2x512xf32> to vector<2x512xf32>
    %c0_97 = arith.constant 0 : index
    %c0_98 = arith.constant 0 : index
    %226 = vector.load %arg1[%c0_97, %c0_98] : memref<128x512xf32, #tpu.memory_space<vmem>>, vector<128x512xf32>
    %cst_99 = arith.constant dense<0.000000e+00> : vector<2x512xf32>
    %227 = tpu.matmul %222, %226, %cst_99 {dimension_numbers = #tpu.dot_dimension_numbers<[1], [0], [0], [1], [0, 0, 1, 1], [], []>} : vector<2x128xf32>, vector<128x512xf32>, vector<2x512xf32> -> vector<2x512xf32>
    %228 = arith.addf %225, %227 : vector<2x512xf32>
    %229 = vector.extract_strided_slice %228 {offsets = [0, 0], sizes = [2, 128], strides = [1, 1]} : vector<2x512xf32> to vector<2x128xf32>
    %cst_100 = arith.constant 5.000000e-01 : f32
    %230 = vector.broadcast %cst_100 : f32 to vector<2x128xf32>
    %231 = arith.mulf %230, %229 : vector<2x128xf32>
    %232 = math.tanh %231 : vector<2x128xf32>
    %cst_101 = arith.constant 5.000000e-01 : f32
    %233 = vector.broadcast %cst_101 : f32 to vector<2x128xf32>
    %234 = arith.mulf %233, %232 : vector<2x128xf32>
    %cst_102 = arith.constant 5.000000e-01 : f32
    %235 = vector.broadcast %cst_102 : f32 to vector<2x128xf32>
    %236 = arith.addf %234, %235 : vector<2x128xf32>
    %237 = vector.extract_strided_slice %228 {offsets = [0, 128], sizes = [2, 128], strides = [1, 1]} : vector<2x512xf32> to vector<2x128xf32>
    %cst_103 = arith.constant 5.000000e-01 : f32
    %238 = vector.broadcast %cst_103 : f32 to vector<2x128xf32>
    %239 = arith.mulf %238, %237 : vector<2x128xf32>
    %240 = math.tanh %239 : vector<2x128xf32>
    %cst_104 = arith.constant 5.000000e-01 : f32
    %241 = vector.broadcast %cst_104 : f32 to vector<2x128xf32>
    %242 = arith.mulf %241, %240 : vector<2x128xf32>
    %cst_105 = arith.constant 5.000000e-01 : f32
    %243 = vector.broadcast %cst_105 : f32 to vector<2x128xf32>
    %244 = arith.addf %242, %243 : vector<2x128xf32>
    %245 = vector.extract_strided_slice %228 {offsets = [0, 256], sizes = [2, 128], strides = [1, 1]} : vector<2x512xf32> to vector<2x128xf32>
    %246 = math.tanh %245 : vector<2x128xf32>
    %247 = vector.extract_strided_slice %228 {offsets = [0, 384], sizes = [2, 128], strides = [1, 1]} : vector<2x512xf32> to vector<2x128xf32>
    %cst_106 = arith.constant 5.000000e-01 : f32
    %248 = vector.broadcast %cst_106 : f32 to vector<2x128xf32>
    %249 = arith.mulf %248, %247 : vector<2x128xf32>
    %250 = math.tanh %249 : vector<2x128xf32>
    %cst_107 = arith.constant 5.000000e-01 : f32
    %251 = vector.broadcast %cst_107 : f32 to vector<2x128xf32>
    %252 = arith.mulf %251, %250 : vector<2x128xf32>
    %cst_108 = arith.constant 5.000000e-01 : f32
    %253 = vector.broadcast %cst_108 : f32 to vector<2x128xf32>
    %254 = arith.addf %252, %253 : vector<2x128xf32>
    %255 = arith.mulf %244, %220 : vector<2x128xf32>
    %256 = arith.mulf %236, %246 : vector<2x128xf32>
    %257 = arith.addf %255, %256 : vector<2x128xf32>
    %258 = math.tanh %257 : vector<2x128xf32>
    %259 = arith.mulf %254, %258 : vector<2x128xf32>
    %c12 = arith.constant 12 : index
    %c0_109 = arith.constant 0 : index
    %260 = vector.load %arg5[%c12, %c0_109] : memref<16x128xf32, #tpu.memory_space<vmem>>, vector<2x128xf32>
    tpu.vector_store %arg5[%c12, %c0_109], %259 {strides = array<i32>} : memref<16x128xf32, #tpu.memory_space<vmem>>, vector<2x128xf32>,
    %c7 = arith.constant 7 : index
    %c0_110 = arith.constant 0 : index
    %c0_111 = arith.constant 0 : index
    %261 = vector.load %arg0[%c7, %c0_110, %c0_111] : memref<8x2x512xf32, #tpu.memory_space<vmem>>, vector<1x2x512xf32>
    %262 = vector.shape_cast %261 : vector<1x2x512xf32> to vector<2x512xf32>
    %c0_112 = arith.constant 0 : index
    %c0_113 = arith.constant 0 : index
    %263 = vector.load %arg1[%c0_112, %c0_113] : memref<128x512xf32, #tpu.memory_space<vmem>>, vector<128x512xf32>
    %cst_114 = arith.constant dense<0.000000e+00> : vector<2x512xf32>
    %264 = tpu.matmul %259, %263, %cst_114 {dimension_numbers = #tpu.dot_dimension_numbers<[1], [0], [0], [1], [0, 0, 1, 1], [], []>} : vector<2x128xf32>, vector<128x512xf32>, vector<2x512xf32> -> vector<2x512xf32>
    %265 = arith.addf %262, %264 : vector<2x512xf32>
    %266 = vector.extract_strided_slice %265 {offsets = [0, 0], sizes = [2, 128], strides = [1, 1]} : vector<2x512xf32> to vector<2x128xf32>
    %cst_115 = arith.constant 5.000000e-01 : f32
    %267 = vector.broadcast %cst_115 : f32 to vector<2x128xf32>
    %268 = arith.mulf %267, %266 : vector<2x128xf32>
    %269 = math.tanh %268 : vector<2x128xf32>
    %cst_116 = arith.constant 5.000000e-01 : f32
    %270 = vector.broadcast %cst_116 : f32 to vector<2x128xf32>
    %271 = arith.mulf %270, %269 : vector<2x128xf32>
    %cst_117 = arith.constant 5.000000e-01 : f32
    %272 = vector.broadcast %cst_117 : f32 to vector<2x128xf32>
    %273 = arith.addf %271, %272 : vector<2x128xf32>
    %274 = vector.extract_strided_slice %265 {offsets = [0, 128], sizes = [2, 128], strides = [1, 1]} : vector<2x512xf32> to vector<2x128xf32>
    %cst_118 = arith.constant 5.000000e-01 : f32
    %275 = vector.broadcast %cst_118 : f32 to vector<2x128xf32>
    %276 = arith.mulf %275, %274 : vector<2x128xf32>
    %277 = math.tanh %276 : vector<2x128xf32>
    %cst_119 = arith.constant 5.000000e-01 : f32
    %278 = vector.broadcast %cst_119 : f32 to vector<2x128xf32>
    %279 = arith.mulf %278, %277 : vector<2x128xf32>
    %cst_120 = arith.constant 5.000000e-01 : f32
    %280 = vector.broadcast %cst_120 : f32 to vector<2x128xf32>
    %281 = arith.addf %279, %280 : vector<2x128xf32>
    %282 = vector.extract_strided_slice %265 {offsets = [0, 256], sizes = [2, 128], strides = [1, 1]} : vector<2x512xf32> to vector<2x128xf32>
    %283 = math.tanh %282 : vector<2x128xf32>
    %284 = vector.extract_strided_slice %265 {offsets = [0, 384], sizes = [2, 128], strides = [1, 1]} : vector<2x512xf32> to vector<2x128xf32>
    %cst_121 = arith.constant 5.000000e-01 : f32
    %285 = vector.broadcast %cst_121 : f32 to vector<2x128xf32>
    %286 = arith.mulf %285, %284 : vector<2x128xf32>
    %287 = math.tanh %286 : vector<2x128xf32>
    %cst_122 = arith.constant 5.000000e-01 : f32
    %288 = vector.broadcast %cst_122 : f32 to vector<2x128xf32>
    %289 = arith.mulf %288, %287 : vector<2x128xf32>
    %cst_123 = arith.constant 5.000000e-01 : f32
    %290 = vector.broadcast %cst_123 : f32 to vector<2x128xf32>
    %291 = arith.addf %289, %290 : vector<2x128xf32>
    %292 = arith.mulf %281, %257 : vector<2x128xf32>
    %293 = arith.mulf %273, %283 : vector<2x128xf32>
    %294 = arith.addf %292, %293 : vector<2x128xf32>
    %295 = math.tanh %294 : vector<2x128xf32>
    %296 = arith.mulf %291, %295 : vector<2x128xf32>
    %c14 = arith.constant 14 : index
    %c0_124 = arith.constant 0 : index
    %297 = vector.load %arg5[%c14, %c0_124] : memref<16x128xf32, #tpu.memory_space<vmem>>, vector<2x128xf32>
    tpu.vector_store %arg5[%c14, %c0_124], %296 {strides = array<i32>} : memref<16x128xf32, #tpu.memory_space<vmem>>, vector<2x128xf32>,
    %c0_125 = arith.constant 0 : index
    %c0_126 = arith.constant 0 : index
    %298 = vector.load %arg5[%c0_125, %c0_126] : memref<16x128xf32, #tpu.memory_space<vmem>>, vector<16x128xf32>
    %c0_127 = arith.constant 0 : index
    %c0_128 = arith.constant 0 : index
    %299 = vector.load %arg2[%c0_127, %c0_128] : memref<1x128xf32, #tpu.memory_space<vmem>>, vector<1x128xf32>
    %300 = vector.broadcast %299 : vector<1x128xf32> to vector<16x128xf32>
    %301 = arith.mulf %298, %300 : vector<16x128xf32>
    %cst_129 = arith.constant dense<0.000000e+00> : vector<16xf32>
    %302 = vector.multi_reduction <add>, %301, %cst_129 [1] : vector<16x128xf32> to vector<16xf32>
    %303 = vector.shape_cast %302 : vector<16xf32> to vector<16x1xf32>
    %c0_130 = arith.constant 0 : index
    %c0_131 = arith.constant 0 : index
    %304 = vector.load %arg3[%c0_130, %c0_131] : memref<1x1xf32, #tpu.memory_space<vmem>>, vector<1x1xf32>
    %305 = vector.broadcast %304 : vector<1x1xf32> to vector<16x1xf32>
    %306 = arith.addf %303, %305 : vector<16x1xf32>
    %c0_132 = arith.constant 0 : index
    %c0_133 = arith.constant 0 : index
    %307 = vector.load %arg4[%c0_132, %c0_133] : memref<16x1xf32, #tpu.memory_space<vmem>>, vector<16x1xf32>
    tpu.vector_store %arg4[%c0_132, %c0_133], %306 {strides = array<i32>} : memref<16x1xf32, #tpu.memory_space<vmem>>, vector<16x1xf32>,
    return
  }
}

</mosaic_0001>

<llo_original>
// kernel: air_model_forward.1
$region0: #{air_model_forward.1}
  #allocation0 [shape = 'u32[]', space=smem, size = 0x4, offset = 0x4, fixed_abs, tag = 'smem constant byte address 0x4 - core index']
  #allocation1 [shape = 'u32[72,128]{1,0:T(1,128)}', space=vmem, size = 0x9000, scoped, tag = 'internal scratch']
  #allocation2 [shape = 'f32[16,128]{1,0:T(8,128)}', space=vmem, size = 0x2000, scoped, tag = 'scratch operand']
  #allocation3 [shape = 'f32[1,1]{1,0:T(1,128)S(1)}', space=vmem, size = 0x200, scoped, tag = 'scoped memory for air_model_forward.1']
  %s0 = inlined_call_operand.vmem [shape: f32[8,2,512], index: 0, kind: input, shape index: {}]
  %s1 = inlined_call_operand.hbm [shape: f32[128,512], index: 1, kind: input, shape index: {}]
  %s2 = inlined_call_operand.vmem [shape: f32[1,128], index: 2, kind: input, shape index: {}]
  %s3 = inlined_call_operand.<no memory space> [shape: f32[1,1], index: 3, kind: input, shape index: {}]
  %s4 = inlined_call_operand.vmem [shape: f32[16,1], index: 4, kind: output, shape index: {}]
  %s5 = sld [smem:[#allocation0]]
  $region30: #{air_model_forward.1} parent=0
    _
  %s7 = ssub.s32 1, %s5
  %s8 = scalar_select 0, %s7, %s5
  %v9 = vstv %s3
  %10 = vst [vmem:[#allocation3] sm:$0x1] %v9
  $region1: #{air_model_forward.1} parent=0
    #allocation4 [shape = 'u8[262144]{0}', space=vmem, size = 0x40000, scoped, tag = 'input window, operand 1, single buffered']
    #allocation5 [shape = 's32[1]{0}', space=sflag, size = 0x4, scoped, tag = 'scoped memory for air_model_forward.1']
    %11 = vsyncpa [#allocation5], 0
    // Predicated region
    $region2: #{air_model_forward.1} parent=1 // pred_check
      _
    $region3: #{air_model_forward.1} parent=1 // pred_check_branch
      %13 = sbr.rel (0) target = $region5
    $region4: #{air_model_forward.1} parent=1 // pred_region
      _
    $region5: #{air_model_forward.1} parent=1 // pred_fallthru
      _
    // Predicated region
    $region6: #{air_model_forward.1} parent=1 // pred_check
      _
    $region7: #{air_model_forward.1} parent=1 // pred_check_branch
      %15 = sbr.rel (0) target = $region9
    $region8: #{air_model_forward.1} parent=1 // pred_region
      %17 = vsyncadd [#allocation5], 0
      %s18 = sshll.u32 %s1, 4
      %s19 = int_to_ptr.hbm [resolvable:$true] %s18
      %s20 = sshll.u32 [#allocation4], 4
      %s21 = int_to_ptr.vmem [resolvable:$true] %s20
      %26 = dma.hbm_to_vmem [thread:$0]  %s19, 8192, %s21, [#allocation5], 512, 512, 32
    $region9: #{air_model_forward.1} parent=1 // pred_fallthru
      _
    // Predicated region
    $region10: #{air_model_forward.1} parent=1 // pred_check
      _
    $region11: #{air_model_forward.1} parent=1 // pred_check_branch
      %28 = sbr.rel (0) target = $region13
    $region12: #{air_model_forward.1} parent=1 // pred_region
      _
    $region13: #{air_model_forward.1} parent=1 // pred_fallthru
      _
    // Predicated region
    $region14: #{air_model_forward.1} parent=1 // pred_check
      _
    $region15: #{air_model_forward.1} parent=1 // pred_check_branch
      %30 = sbr.rel (0) target = $region17
    $region16: #{air_model_forward.1} parent=1 // pred_region
      _
    $region17: #{air_model_forward.1} parent=1 // pred_fallthru
      _
    // Predicated region
    $region18: #{air_model_forward.1} parent=1 // pred_check
      _
    $region19: #{air_model_forward.1} parent=1 // pred_check_branch
      %32 = sbr.rel (0) target = $region21
    $region20: #{air_model_forward.1} parent=1 // pred_region
      %34 = dma.done [#allocation5], 8192
    $region21: #{air_model_forward.1} parent=1 // pred_fallthru
      _
    %v35 = vld [vmem:[%s0] sm:$0xff]
    %v36 = vld [vmem:[#allocation4] sm:$0xff]
    %v37 = vld [vmem:[#allocation4 + $0x8] sm:$0xff]
    %v38 = vld [vmem:[#allocation4 + $0x10] sm:$0xff]
    %v39 = vld [vmem:[#allocation4 + $0x18] sm:$0xff]
    %v40 = vld [vmem:[#allocation4 + $0x20] sm:$0xff]
    %v41 = vld [vmem:[#allocation4 + $0x28] sm:$0xff]
    %v42 = vld [vmem:[#allocation4 + $0x30] sm:$0xff]
    %v43 = vld [vmem:[#allocation4 + $0x38] sm:$0xff]
    %v44 = vld [vmem:[#allocation4 + $0x40] sm:$0xff]
    %v45 = vld [vmem:[#allocation4 + $0x48] sm:$0xff]
    %v46 = vld [vmem:[#allocation4 + $0x50] sm:$0xff]
    %v47 = vld [vmem:[#allocation4 + $0x58] sm:$0xff]
    %v48 = vld [vmem:[#allocation4 + $0x60] sm:$0xff]
    %v49 = vld [vmem:[#allocation4 + $0x68] sm:$0xff]
    %v50 = vld [vmem:[#allocation4 + $0x70] sm:$0xff]
    %v51 = vld [vmem:[#allocation4 + $0x78] sm:$0xff]
    %v52 = vld [vmem:[#allocation4 + $0x80] sm:$0xff]
    %v53 = vld [vmem:[#allocation4 + $0x88] sm:$0xff]
    %v54 = vld [vmem:[#allocation4 + $0x90] sm:$0xff]
    %v55 = vld [vmem:[#allocation4 + $0x98] sm:$0xff]
    %v56 = vld [vmem:[#allocation4 + $0xa0] sm:$0xff]
    %v57 = vld [vmem:[#allocation4 + $0xa8] sm:$0xff]
    %v58 = vld [vmem:[#allocation4 + $0xb0] sm:$0xff]
    %v59 = vld [vmem:[#allocation4 + $0xb8] sm:$0xff]
    %v60 = vld [vmem:[#allocation4 + $0xc0] sm:$0xff]
    %v61 = vld [vmem:[#allocation4 + $0xc8] sm:$0xff]
    %v62 = vld [vmem:[#allocation4 + $0xd0] sm:$0xff]
    %v63 = vld [vmem:[#allocation4 + $0xd8] sm:$0xff]
    %v64 = vld [vmem:[#allocation4 + $0xe0] sm:$0xff]
    %v65 = vld [vmem:[#allocation4 + $0xe8] sm:$0xff]
    %v66 = vld [vmem:[#allocation4 + $0xf0] sm:$0xff]
    %v67 = vld [vmem:[#allocation4 + $0xf8] sm:$0xff]
    %v68 = vld [vmem:[#allocation4 + $0x100] sm:$0xff]
    %v69 = vld [vmem:[#allocation4 + $0x108] sm:$0xff]
    %v70 = vld [vmem:[#allocation4 + $0x110] sm:$0xff]
    %v71 = vld [vmem:[#allocation4 + $0x118] sm:$0xff]
    %v72 = vld [vmem:[#allocation4 + $0x120] sm:$0xff]
    %v73 = vld [vmem:[#allocation4 + $0x128] sm:$0xff]
    %v74 = vld [vmem:[#allocation4 + $0x130] sm:$0xff]
    %v75 = vld [vmem:[#allocation4 + $0x138] sm:$0xff]
    %v76 = vld [vmem:[#allocation4 + $0x140] sm:$0xff]
    %v77 = vld [vmem:[#allocation4 + $0x148] sm:$0xff]
    %v78 = vld [vmem:[#allocation4 + $0x150] sm:$0xff]
    %v79 = vld [vmem:[#allocation4 + $0x158] sm:$0xff]
    %v80 = vld [vmem:[#allocation4 + $0x160] sm:$0xff]
    %v81 = vld [vmem:[#allocation4 + $0x168] sm:$0xff]
    %v82 = vld [vmem:[#allocation4 + $0x170] sm:$0xff]
    %v83 = vld [vmem:[#allocation4 + $0x178] sm:$0xff]
    %v84 = vld [vmem:[#allocation4 + $0x180] sm:$0xff]
    %v85 = vld [vmem:[#allocation4 + $0x188] sm:$0xff]
    %v86 = vld [vmem:[#allocation4 + $0x190] sm:$0xff]
    %v87 = vld [vmem:[#allocation4 + $0x198] sm:$0xff]
    %v88 = vld [vmem:[#allocation4 + $0x1a0] sm:$0xff]
    %v89 = vld [vmem:[#allocation4 + $0x1a8] sm:$0xff]
    %v90 = vld [vmem:[#allocation4 + $0x1b0] sm:$0xff]
    %v91 = vld [vmem:[#allocation4 + $0x1b8] sm:$0xff]
    %v92 = vld [vmem:[#allocation4 + $0x1c0] sm:$0xff]
    %v93 = vld [vmem:[#allocation4 + $0x1c8] sm:$0xff]
    %v94 = vld [vmem:[#allocation4 + $0x1d0] sm:$0xff]
    %v95 = vld [vmem:[#allocation4 + $0x1d8] sm:$0xff]
    %v96 = vld [vmem:[#allocation4 + $0x1e0] sm:$0xff]
    %v97 = vld [vmem:[#allocation4 + $0x1e8] sm:$0xff]
    %v98 = vld [vmem:[#allocation4 + $0x1f0] sm:$0xff]
    %v99 = vld [vmem:[#allocation4 + $0x1f8] sm:$0xff]
    %100 = vmatpush.msra.mxu0 %v96
    %101 = vmatpush.msra.mxu0 %v92
    %102 = vmatpush.msra.mxu0 %v88
    %103 = vmatpush.msra.mxu0 %v84
    %104 = vmatpush.msra.mxu0 %v80
    %105 = vmatpush.msra.mxu0 %v76
    %106 = vmatpush.msra.mxu0 %v72
    %107 = vmatpush.msra.mxu0 %v68
    %108 = vmatpush.msra.mxu0 %v64
    %109 = vmatpush.msra.mxu0 %v60
    %110 = vmatpush.msra.mxu0 %v56
    %111 = vmatpush.msra.mxu0 %v52
    %112 = vmatpush.msra.mxu0 %v48
    %113 = vmatpush.msra.mxu0 %v44
    %114 = vmatpush.msra.mxu0 %v40
    %115 = vmatpush.msra.mxu0 %v36
    %116 = vmatmul.f32.gmra.mxu0 0.0
    %v117 = vpop.f32.mrf.mxu0
    %v118 = vadd.f32 0.0, %v117
    %119 = vdwg.mxu0
    %120 = vmatpush.msra.mxu0 %v97
    %121 = vmatpush.msra.mxu0 %v93
    %122 = vmatpush.msra.mxu0 %v89
    %123 = vmatpush.msra.mxu0 %v85
    %124 = vmatpush.msra.mxu0 %v81
    %125 = vmatpush.msra.mxu0 %v77
    %126 = vmatpush.msra.mxu0 %v73
    %127 = vmatpush.msra.mxu0 %v69
    %128 = vmatpush.msra.mxu0 %v65
    %129 = vmatpush.msra.mxu0 %v61
    %130 = vmatpush.msra.mxu0 %v57
    %131 = vmatpush.msra.mxu0 %v53
    %132 = vmatpush.msra.mxu0 %v49
    %133 = vmatpush.msra.mxu0 %v45
    %134 = vmatpush.msra.mxu0 %v41
    %135 = vmatpush.msra.mxu0 %v37
    %136 = vmatmul.f32.gmra.mxu0 0.0
    %v137 = vpop.f32.mrf.mxu0
    %v138 = vadd.f32 0.0, %v137
    %139 = vdwg.mxu0
    %140 = vmatpush.msra.mxu0 %v98
    %141 = vmatpush.msra.mxu0 %v94
    %142 = vmatpush.msra.mxu0 %v90
    %143 = vmatpush.msra.mxu0 %v86
    %144 = vmatpush.msra.mxu0 %v82
    %145 = vmatpush.msra.mxu0 %v78
    %146 = vmatpush.msra.mxu0 %v74
    %147 = vmatpush.msra.mxu0 %v70
    %148 = vmatpush.msra.mxu0 %v66
    %149 = vmatpush.msra.mxu0 %v62
    %150 = vmatpush.msra.mxu0 %v58
    %151 = vmatpush.msra.mxu0 %v54
    %152 = vmatpush.msra.mxu0 %v50
    %153 = vmatpush.msra.mxu0 %v46
    %154 = vmatpush.msra.mxu0 %v42
    %155 = vmatpush.msra.mxu0 %v38
    %156 = vmatmul.f32.gmra.mxu0 0.0
    %v157 = vpop.f32.mrf.mxu0
    %v158 = vadd.f32 0.0, %v157
    %159 = vdwg.mxu0
    %160 = vmatpush.msra.mxu0 %v99
    %161 = vmatpush.msra.mxu0 %v95
    %162 = vmatpush.msra.mxu0 %v91
    %163 = vmatpush.msra.mxu0 %v87
    %164 = vmatpush.msra.mxu0 %v83
    %165 = vmatpush.msra.mxu0 %v79
    %166 = vmatpush.msra.mxu0 %v75
    %167 = vmatpush.msra.mxu0 %v71
    %168 = vmatpush.msra.mxu0 %v67
    %169 = vmatpush.msra.mxu0 %v63
    %170 = vmatpush.msra.mxu0 %v59
    %171 = vmatpush.msra.mxu0 %v55
    %172 = vmatpush.msra.mxu0 %v51
    %173 = vmatpush.msra.mxu0 %v47
    %174 = vmatpush.msra.mxu0 %v43
    %175 = vmatpush.msra.mxu0 %v39
    %176 = vmatmul.f32.gmra.mxu0 0.0
    %v177 = vpop.f32.mrf.mxu0
    %v178 = vadd.f32 0.0, %v177
    %179 = vdwg.mxu0
    %v184 = vrot.slane %v138, 6
    %v185 = vrot.slane %v158, 4
    %v186 = vrot.slane %v178, 2
    %vm187 = vcmask 1041408
    %v188 = vsel %vm187, %v118, %v184
    %vm189 = vcmask 1045508
    %v190 = vsel %vm189, %v185, %v186
    %vm191 = vcmask 1043456
    %v192 = vsel %vm191, %v188, %v190
    %v194 = vadd.f32 %v35, %v192
    %v195 = vmul.f32 %v194, 0.5
    %v196 = vtanh.pop %v195
    %v197 = vmul.f32 %v196, 0.5
    %v198 = vadd.f32 %v197, 0.5
    %v200 = vrot.slane %v194, 2
    %v202 = vmul.f32 %v200, 0.5
    %v203 = vtanh.pop %v202
    %v204 = vmul.f32 %v203, 0.5
    %v205 = vadd.f32 %v204, 0.5
    %v206 = vrot.slane %v194, 4
    %v208 = vtanh.pop %v206
    %v209 = vrot.slane %v194, 6
    %v211 = vmul.f32 %v209, 0.5
    %v212 = vtanh.pop %v211
    %v213 = vmul.f32 %v212, 0.5
    %v214 = vadd.f32 %v213, 0.5
    %v215 = vmul.f32 %v205, 0.0
    %v216 = vmul.f32 %v198, %v208
    %v217 = vadd.f32 %v215, %v216
    %v218 = vtanh.pop %v217
    %v219 = vmul.f32 %v214, %v218
    %220 = vst [vmem:[#allocation2] sm:$0x3] %v219
    %s221 = scalar_lea.vmem %s0, 8
    %v222 = vld [vmem:[%s221] sm:$0xff]
    %v223 = vld [vmem:[#allocation4] sm:$0xff]
    %v224 = vld [vmem:[#allocation4 + $0x8] sm:$0xff]
    %v225 = vld [vmem:[#allocation4 + $0x10] sm:$0xff]
    %v226 = vld [vmem:[#allocation4 + $0x18] sm:$0xff]
    %v227 = vld [vmem:[#allocation4 + $0x20] sm:$0xff]
    %v228 = vld [vmem:[#allocation4 + $0x28] sm:$0xff]
    %v229 = vld [vmem:[#allocation4 + $0x30] sm:$0xff]
    %v230 = vld [vmem:[#allocation4 + $0x38] sm:$0xff]
    %v231 = vld [vmem:[#allocation4 + $0x40] sm:$0xff]
    %v232 = vld [vmem:[#allocation4 + $0x48] sm:$0xff]
    %v233 = vld [vmem:[#allocation4 + $0x50] sm:$0xff]
    %v234 = vld [vmem:[#allocation4 + $0x58] sm:$0xff]
    %v235 = vld [vmem:[#allocation4 + $0x60] sm:$0xff]
    %v236 = vld [vmem:[#allocation4 + $0x68] sm:$0xff]
    %v237 = vld [vmem:[#allocation4 + $0x70] sm:$0xff]
    %v238 = vld [vmem:[#allocation4 + $0x78] sm:$0xff]
    %v239 = vld [vmem:[#allocation4 + $0x80] sm:$0xff]
    %v240 = vld [vmem:[#allocation4 + $0x88] sm:$0xff]
    %v241 = vld [vmem:[#allocation4 + $0x90] sm:$0xff]
    %v242 = vld [vmem:[#allocation4 + $0x98] sm:$0xff]
    %v243 = vld [vmem:[#allocation4 + $0xa0] sm:$0xff]
    %v244 = vld [vmem:[#allocation4 + $0xa8] sm:$0xff]
    %v245 = vld [vmem:[#allocation4 + $0xb0] sm:$0xff]
    %v246 = vld [vmem:[#allocation4 + $0xb8] sm:$0xff]
    %v247 = vld [vmem:[#allocation4 + $0xc0] sm:$0xff]
    %v248 = vld [vmem:[#allocation4 + $0xc8] sm:$0xff]
    %v249 = vld [vmem:[#allocation4 + $0xd0] sm:$0xff]
    %v250 = vld [vmem:[#allocation4 + $0xd8] sm:$0xff]
    %v251 = vld [vmem:[#allocation4 + $0xe0] sm:$0xff]
    %v252 = vld [vmem:[#allocation4 + $0xe8] sm:$0xff]
    %v253 = vld [vmem:[#allocation4 + $0xf0] sm:$0xff]
    %v254 = vld [vmem:[#allocation4 + $0xf8] sm:$0xff]
    %v255 = vld [vmem:[#allocation4 + $0x100] sm:$0xff]
    %v256 = vld [vmem:[#allocation4 + $0x108] sm:$0xff]
    %v257 = vld [vmem:[#allocation4 + $0x110] sm:$0xff]
    %v258 = vld [vmem:[#allocation4 + $0x118] sm:$0xff]
    %v259 = vld [vmem:[#allocation4 + $0x120] sm:$0xff]
    %v260 = vld [vmem:[#allocation4 + $0x128] sm:$0xff]
    %v261 = vld [vmem:[#allocation4 + $0x130] sm:$0xff]
    %v262 = vld [vmem:[#allocation4 + $0x138] sm:$0xff]
    %v263 = vld [vmem:[#allocation4 + $0x140] sm:$0xff]
    %v264 = vld [vmem:[#allocation4 + $0x148] sm:$0xff]
    %v265 = vld [vmem:[#allocation4 + $0x150] sm:$0xff]
    %v266 = vld [vmem:[#allocation4 + $0x158] sm:$0xff]
    %v267 = vld [vmem:[#allocation4 + $0x160] sm:$0xff]
    %v268 = vld [vmem:[#allocation4 + $0x168] sm:$0xff]
    %v269 = vld [vmem:[#allocation4 + $0x170] sm:$0xff]
    %v270 = vld [vmem:[#allocation4 + $0x178] sm:$0xff]
    %v271 = vld [vmem:[#allocation4 + $0x180] sm:$0xff]
    %v272 = vld [vmem:[#allocation4 + $0x188] sm:$0xff]
    %v273 = vld [vmem:[#allocation4 + $0x190] sm:$0xff]
    %v274 = vld [vmem:[#allocation4 + $0x198] sm:$0xff]
    %v275 = vld [vmem:[#allocation4 + $0x1a0] sm:$0xff]
    %v276 = vld [vmem:[#allocation4 + $0x1a8] sm:$0xff]
    %v277 = vld [vmem:[#allocation4 + $0x1b0] sm:$0xff]
    %v278 = vld [vmem:[#allocation4 + $0x1b8] sm:$0xff]
    %v279 = vld [vmem:[#allocation4 + $0x1c0] sm:$0xff]
    %v280 = vld [vmem:[#allocation4 + $0x1c8] sm:$0xff]
    %v281 = vld [vmem:[#allocation4 + $0x1d0] sm:$0xff]
    %v282 = vld [vmem:[#allocation4 + $0x1d8] sm:$0xff]
    %v283 = vld [vmem:[#allocation4 + $0x1e0] sm:$0xff]
    %v284 = vld [vmem:[#allocation4 + $0x1e8] sm:$0xff]
    %v285 = vld [vmem:[#allocation4 + $0x1f0] sm:$0xff]
    %v286 = vld [vmem:[#allocation4 + $0x1f8] sm:$0xff]
    %287 = vmatpush.msra.mxu0 %v283
    %288 = vmatpush.msra.mxu0 %v279
    %289 = vmatpush.msra.mxu0 %v275
    %290 = vmatpush.msra.mxu0 %v271
    %291 = vmatpush.msra.mxu0 %v267
    %292 = vmatpush.msra.mxu0 %v263
    %293 = vmatpush.msra.mxu0 %v259
    %294 = vmatpush.msra.mxu0 %v255
    %295 = vmatpush.msra.mxu0 %v251
    %296 = vmatpush.msra.mxu0 %v247
    %297 = vmatpush.msra.mxu0 %v243
    %298 = vmatpush.msra.mxu0 %v239
    %299 = vmatpush.msra.mxu0 %v235
    %300 = vmatpush.msra.mxu0 %v231
    %301 = vmatpush.msra.mxu0 %v227
    %302 = vmatpush.msra.mxu0 %v223
    %303 = vmatmul.f32.gmra.mxu0 %v219
    %v304 = vpop.f32.mrf.mxu0
    %v305 = vadd.f32 0.0, %v304
    %306 = vdwg.mxu0
    %307 = vmatpush.msra.mxu0 %v284
    %308 = vmatpush.msra.mxu0 %v280
    %309 = vmatpush.msra.mxu0 %v276
    %310 = vmatpush.msra.mxu0 %v272
    %311 = vmatpush.msra.mxu0 %v268
    %312 = vmatpush.msra.mxu0 %v264
    %313 = vmatpush.msra.mxu0 %v260
    %314 = vmatpush.msra.mxu0 %v256
    %315 = vmatpush.msra.mxu0 %v252
    %316 = vmatpush.msra.mxu0 %v248
    %317 = vmatpush.msra.mxu0 %v244
    %318 = vmatpush.msra.mxu0 %v240
    %319 = vmatpush.msra.mxu0 %v236
    %320 = vmatpush.msra.mxu0 %v232
    %321 = vmatpush.msra.mxu0 %v228
    %322 = vmatpush.msra.mxu0 %v224
    %323 = vmatmul.f32.gmra.mxu0 %v219
    %v324 = vpop.f32.mrf.mxu0
    %v325 = vadd.f32 0.0, %v324
    %326 = vdwg.mxu0
    %327 = vmatpush.msra.mxu0 %v285
    %328 = vmatpush.msra.mxu0 %v281
    %329 = vmatpush.msra.mxu0 %v277
    %330 = vmatpush.msra.mxu0 %v273
    %331 = vmatpush.msra.mxu0 %v269
    %332 = vmatpush.msra.mxu0 %v265
    %333 = vmatpush.msra.mxu0 %v261
    %334 = vmatpush.msra.mxu0 %v257
    %335 = vmatpush.msra.mxu0 %v253
    %336 = vmatpush.msra.mxu0 %v249
    %337 = vmatpush.msra.mxu0 %v245
    %338 = vmatpush.msra.mxu0 %v241
    %339 = vmatpush.msra.mxu0 %v237
    %340 = vmatpush.msra.mxu0 %v233
    %341 = vmatpush.msra.mxu0 %v229
    %342 = vmatpush.msra.mxu0 %v225
    %343 = vmatmul.f32.gmra.mxu0 %v219
    %v344 = vpop.f32.mrf.mxu0
    %v345 = vadd.f32 0.0, %v344
    %346 = vdwg.mxu0
    %347 = vmatpush.msra.mxu0 %v286
    %348 = vmatpush.msra.mxu0 %v282
    %349 = vmatpush.msra.mxu0 %v278
    %350 = vmatpush.msra.mxu0 %v274
    %351 = vmatpush.msra.mxu0 %v270
    %352 = vmatpush.msra.mxu0 %v266
    %353 = vmatpush.msra.mxu0 %v262
    %354 = vmatpush.msra.mxu0 %v258
    %355 = vmatpush.msra.mxu0 %v254
    %356 = vmatpush.msra.mxu0 %v250
    %357 = vmatpush.msra.mxu0 %v246
    %358 = vmatpush.msra.mxu0 %v242
    %359 = vmatpush.msra.mxu0 %v238
    %360 = vmatpush.msra.mxu0 %v234
    %361 = vmatpush.msra.mxu0 %v230
    %362 = vmatpush.msra.mxu0 %v226
    %363 = vmatmul.f32.gmra.mxu0 %v219
    %v364 = vpop.f32.mrf.mxu0
    %v365 = vadd.f32 0.0, %v364
    %366 = vdwg.mxu0
    %v371 = vrot.slane %v325, 6
    %v372 = vrot.slane %v345, 4
    %v373 = vrot.slane %v365, 2
    %v374 = vsel %vm187, %v305, %v371
    %v375 = vsel %vm189, %v372, %v373
    %v376 = vsel %vm191, %v374, %v375
    %v378 = vadd.f32 %v222, %v376
    %v379 = vmul.f32 %v378, 0.5
    %v380 = vtanh.pop %v379
    %v381 = vmul.f32 %v380, 0.5
    %v382 = vadd.f32 %v381, 0.5
    %v384 = vrot.slane %v378, 2
    %v386 = vmul.f32 %v384, 0.5
    %v387 = vtanh.pop %v386
    %v388 = vmul.f32 %v387, 0.5
    %v389 = vadd.f32 %v388, 0.5
    %v390 = vrot.slane %v378, 4
    %v392 = vtanh.pop %v390
    %v393 = vrot.slane %v378, 6
    %v395 = vmul.f32 %v393, 0.5
    %v396 = vtanh.pop %v395
    %v397 = vmul.f32 %v396, 0.5
    %v398 = vadd.f32 %v397, 0.5
    %v399 = vmul.f32 %v389, %v217
    %v400 = vmul.f32 %v382, %v392
    %v401 = vadd.f32 %v399, %v400
    %v402 = vtanh.pop %v401
    %v403 = vmul.f32 %v398, %v402
    %404 = vst [vmem:[#allocation2 + $0x2] sm:$0x3] %v403
    %s405 = scalar_lea.vmem %s0, 16
    %v406 = vld [vmem:[%s405] sm:$0xff]
    %v407 = vld [vmem:[#allocation4] sm:$0xff]
    %v408 = vld [vmem:[#allocation4 + $0x8] sm:$0xff]
    %v409 = vld [vmem:[#allocation4 + $0x10] sm:$0xff]
    %v410 = vld [vmem:[#allocation4 + $0x18] sm:$0xff]
    %v411 = vld [vmem:[#allocation4 + $0x20] sm:$0xff]
    %v412 = vld [vmem:[#allocation4 + $0x28] sm:$0xff]
    %v413 = vld [vmem:[#allocation4 + $0x30] sm:$0xff]
    %v414 = vld [vmem:[#allocation4 + $0x38] sm:$0xff]
    %v415 = vld [vmem:[#allocation4 + $0x40] sm:$0xff]
    %v416 = vld [vmem:[#allocation4 + $0x48] sm:$0xff]
    %v417 = vld [vmem:[#allocation4 + $0x50] sm:$0xff]
    %v418 = vld [vmem:[#allocation4 + $0x58] sm:$0xff]
    %v419 = vld [vmem:[#allocation4 + $0x60] sm:$0xff]
    %v420 = vld [vmem:[#allocation4 + $0x68] sm:$0xff]
    %v421 = vld [vmem:[#allocation4 + $0x70] sm:$0xff]
    %v422 = vld [vmem:[#allocation4 + $0x78] sm:$0xff]
    %v423 = vld [vmem:[#allocation4 + $0x80] sm:$0xff]
    %v424 = vld [vmem:[#allocation4 + $0x88] sm:$0xff]
    %v425 = vld [vmem:[#allocation4 + $0x90] sm:$0xff]
    %v426 = vld [vmem:[#allocation4 + $0x98] sm:$0xff]
    %v427 = vld [vmem:[#allocation4 + $0xa0] sm:$0xff]
    %v428 = vld [vmem:[#allocation4 + $0xa8] sm:$0xff]
    %v429 = vld [vmem:[#allocation4 + $0xb0] sm:$0xff]
    %v430 = vld [vmem:[#allocation4 + $0xb8] sm:$0xff]
    %v431 = vld [vmem:[#allocation4 + $0xc0] sm:$0xff]
    %v432 = vld [vmem:[#allocation4 + $0xc8] sm:$0xff]
    %v433 = vld [vmem:[#allocation4 + $0xd0] sm:$0xff]
    %v434 = vld [vmem:[#allocation4 + $0xd8] sm:$0xff]
    %v435 = vld [vmem:[#allocation4 + $0xe0] sm:$0xff]
    %v436 = vld [vmem:[#allocation4 + $0xe8] sm:$0xff]
    %v437 = vld [vmem:[#allocation4 + $0xf0] sm:$0xff]
    %v438 = vld [vmem:[#allocation4 + $0xf8] sm:$0xff]
    %v439 = vld [vmem:[#allocation4 + $0x100] sm:$0xff]
    %v440 = vld [vmem:[#allocation4 + $0x108] sm:$0xff]
    %v441 = vld [vmem:[#allocation4 + $0x110] sm:$0xff]
    %v442 = vld [vmem:[#allocation4 + $0x118] sm:$0xff]
    %v443 = vld [vmem:[#allocation4 + $0x120] sm:$0xff]
    %v444 = vld [vmem:[#allocation4 + $0x128] sm:$0xff]
    %v445 = vld [vmem:[#allocation4 + $0x130] sm:$0xff]
    %v446 = vld [vmem:[#allocation4 + $0x138] sm:$0xff]
    %v447 = vld [vmem:[#allocation4 + $0x140] sm:$0xff]
    %v448 = vld [vmem:[#allocation4 + $0x148] sm:$0xff]
    %v449 = vld [vmem:[#allocation4 + $0x150] sm:$0xff]
    %v450 = vld [vmem:[#allocation4 + $0x158] sm:$0xff]
    %v451 = vld [vmem:[#allocation4 + $0x160] sm:$0xff]
    %v452 = vld [vmem:[#allocation4 + $0x168] sm:$0xff]
    %v453 = vld [vmem:[#allocation4 + $0x170] sm:$0xff]
    %v454 = vld [vmem:[#allocation4 + $0x178] sm:$0xff]
    %v455 = vld [vmem:[#allocation4 + $0x180] sm:$0xff]
    %v456 = vld [vmem:[#allocation4 + $0x188] sm:$0xff]
    %v457 = vld [vmem:[#allocation4 + $0x190] sm:$0xff]
    %v458 = vld [vmem:[#allocation4 + $0x198] sm:$0xff]
    %v459 = vld [vmem:[#allocation4 + $0x1a0] sm:$0xff]
    %v460 = vld [vmem:[#allocation4 + $0x1a8] sm:$0xff]
    %v461 = vld [vmem:[#allocation4 + $0x1b0] sm:$0xff]
    %v462 = vld [vmem:[#allocation4 + $0x1b8] sm:$0xff]
    %v463 = vld [vmem:[#allocation4 + $0x1c0] sm:$0xff]
    %v464 = vld [vmem:[#allocation4 + $0x1c8] sm:$0xff]
    %v465 = vld [vmem:[#allocation4 + $0x1d0] sm:$0xff]
    %v466 = vld [vmem:[#allocation4 + $0x1d8] sm:$0xff]
    %v467 = vld [vmem:[#allocation4 + $0x1e0] sm:$0xff]
    %v468 = vld [vmem:[#allocation4 + $0x1e8] sm:$0xff]
    %v469 = vld [vmem:[#allocation4 + $0x1f0] sm:$0xff]
    %v470 = vld [vmem:[#allocation4 + $0x1f8] sm:$0xff]
    %471 = vmatpush.msra.mxu0 %v467
    %472 = vmatpush.msra.mxu0 %v463
    %473 = vmatpush.msra.mxu0 %v459
    %474 = vmatpush.msra.mxu0 %v455
    %475 = vmatpush.msra.mxu0 %v451
    %476 = vmatpush.msra.mxu0 %v447
    %477 = vmatpush.msra.mxu0 %v443
    %478 = vmatpush.msra.mxu0 %v439
    %479 = vmatpush.msra.mxu0 %v435
    %480 = vmatpush.msra.mxu0 %v431
    %481 = vmatpush.msra.mxu0 %v427
    %482 = vmatpush.msra.mxu0 %v423
    %483 = vmatpush.msra.mxu0 %v419
    %484 = vmatpush.msra.mxu0 %v415
    %485 = vmatpush.msra.mxu0 %v411
    %486 = vmatpush.msra.mxu0 %v407
    %487 = vmatmul.f32.gmra.mxu0 %v403
    %v488 = vpop.f32.mrf.mxu0
    %v489 = vadd.f32 0.0, %v488
    %490 = vdwg.mxu0
    %491 = vmatpush.msra.mxu0 %v468
    %492 = vmatpush.msra.mxu0 %v464
    %493 = vmatpush.msra.mxu0 %v460
    %494 = vmatpush.msra.mxu0 %v456
    %495 = vmatpush.msra.mxu0 %v452
    %496 = vmatpush.msra.mxu0 %v448
    %497 = vmatpush.msra.mxu0 %v444
    %498 = vmatpush.msra.mxu0 %v440
    %499 = vmatpush.msra.mxu0 %v436
    %500 = vmatpush.msra.mxu0 %v432
    %501 = vmatpush.msra.mxu0 %v428
    %502 = vmatpush.msra.mxu0 %v424
    %503 = vmatpush.msra.mxu0 %v420
    %504 = vmatpush.msra.mxu0 %v416
    %505 = vmatpush.msra.mxu0 %v412
    %506 = vmatpush.msra.mxu0 %v408
    %507 = vmatmul.f32.gmra.mxu0 %v403
    %v508 = vpop.f32.mrf.mxu0
    %v509 = vadd.f32 0.0, %v508
    %510 = vdwg.mxu0
    %511 = vmatpush.msra.mxu0 %v469
    %512 = vmatpush.msra.mxu0 %v465
    %513 = vmatpush.msra.mxu0 %v461
    %514 = vmatpush.msra.mxu0 %v457
    %515 = vmatpush.msra.mxu0 %v453
    %516 = vmatpush.msra.mxu0 %v449
    %517 = vmatpush.msra.mxu0 %v445
    %518 = vmatpush.msra.mxu0 %v441
    %519 = vmatpush.msra.mxu0 %v437
    %520 = vmatpush.msra.mxu0 %v433
    %521 = vmatpush.msra.mxu0 %v429
    %522 = vmatpush.msra.mxu0 %v425
    %523 = vmatpush.msra.mxu0 %v421
    %524 = vmatpush.msra.mxu0 %v417
    %525 = vmatpush.msra.mxu0 %v413
    %526 = vmatpush.msra.mxu0 %v409
    %527 = vmatmul.f32.gmra.mxu0 %v403
    %v528 = vpop.f32.mrf.mxu0
    %v529 = vadd.f32 0.0, %v528
    %530 = vdwg.mxu0
    %531 = vmatpush.msra.mxu0 %v470
    %532 = vmatpush.msra.mxu0 %v466
    %533 = vmatpush.msra.mxu0 %v462
    %534 = vmatpush.msra.mxu0 %v458
    %535 = vmatpush.msra.mxu0 %v454
    %536 = vmatpush.msra.mxu0 %v450
    %537 = vmatpush.msra.mxu0 %v446
    %538 = vmatpush.msra.mxu0 %v442
    %539 = vmatpush.msra.mxu0 %v438
    %540 = vmatpush.msra.mxu0 %v434
    %541 = vmatpush.msra.mxu0 %v430
    %542 = vmatpush.msra.mxu0 %v426
    %543 = vmatpush.msra.mxu0 %v422
    %544 = vmatpush.msra.mxu0 %v418
    %545 = vmatpush.msra.mxu0 %v414
    %546 = vmatpush.msra.mxu0 %v410
    %547 = vmatmul.f32.gmra.mxu0 %v403
    %v548 = vpop.f32.mrf.mxu0
    %v549 = vadd.f32 0.0, %v548
    %550 = vdwg.mxu0
    %v555 = vrot.slane %v509, 6
    %v556 = vrot.slane %v529, 4
    %v557 = vrot.slane %v549, 2
    %v558 = vsel %vm187, %v489, %v555
    %v559 = vsel %vm189, %v556, %v557
    %v560 = vsel %vm191, %v558, %v559
    %v562 = vadd.f32 %v406, %v560
    %v563 = vmul.f32 %v562, 0.5
    %v564 = vtanh.pop %v563
    %v565 = vmul.f32 %v564, 0.5
    %v566 = vadd.f32 %v565, 0.5
    %v568 = vrot.slane %v562, 2
    %v570 = vmul.f32 %v568, 0.5
    %v571 = vtanh.pop %v570
    %v572 = vmul.f32 %v571, 0.5
    %v573 = vadd.f32 %v572, 0.5
    %v574 = vrot.slane %v562, 4
    %v576 = vtanh.pop %v574
    %v577 = vrot.slane %v562, 6
    %v579 = vmul.f32 %v577, 0.5
    %v580 = vtanh.pop %v579
    %v581 = vmul.f32 %v580, 0.5
    %v582 = vadd.f32 %v581, 0.5
    %v583 = vmul.f32 %v573, %v401
    %v584 = vmul.f32 %v566, %v576
    %v585 = vadd.f32 %v583, %v584
    %v586 = vtanh.pop %v585
    %v587 = vmul.f32 %v582, %v586
    %588 = vst [vmem:[#allocation2 + $0x4] sm:$0x3] %v587
    %s589 = scalar_lea.vmem %s0, 24
    %v590 = vld [vmem:[%s589] sm:$0xff]
    %v591 = vld [vmem:[#allocation4] sm:$0xff]
    %v592 = vld [vmem:[#allocation4 + $0x8] sm:$0xff]
    %v593 = vld [vmem:[#allocation4 + $0x10] sm:$0xff]
    %v594 = vld [vmem:[#allocation4 + $0x18] sm:$0xff]
    %v595 = vld [vmem:[#allocation4 + $0x20] sm:$0xff]
    %v596 = vld [vmem:[#allocation4 + $0x28] sm:$0xff]
    %v597 = vld [vmem:[#allocation4 + $0x30] sm:$0xff]
    %v598 = vld [vmem:[#allocation4 + $0x38] sm:$0xff]
    %v599 = vld [vmem:[#allocation4 + $0x40] sm:$0xff]
    %v600 = vld [vmem:[#allocation4 + $0x48] sm:$0xff]
    %v601 = vld [vmem:[#allocation4 + $0x50] sm:$0xff]
    %v602 = vld [vmem:[#allocation4 + $0x58] sm:$0xff]
    %v603 = vld [vmem:[#allocation4 + $0x60] sm:$0xff]
    %v604 = vld [vmem:[#allocation4 + $0x68] sm:$0xff]
    %v605 = vld [vmem:[#allocation4 + $0x70] sm:$0xff]
    %v606 = vld [vmem:[#allocation4 + $0x78] sm:$0xff]
    %v607 = vld [vmem:[#allocation4 + $0x80] sm:$0xff]
    %v608 = vld [vmem:[#allocation4 + $0x88] sm:$0xff]
    %v609 = vld [vmem:[#allocation4 + $0x90] sm:$0xff]
    %v610 = vld [vmem:[#allocation4 + $0x98] sm:$0xff]
    %v611 = vld [vmem:[#allocation4 + $0xa0] sm:$0xff]
    %v612 = vld [vmem:[#allocation4 + $0xa8] sm:$0xff]
    %v613 = vld [vmem:[#allocation4 + $0xb0] sm:$0xff]
    %v614 = vld [vmem:[#allocation4 + $0xb8] sm:$0xff]
    %v615 = vld [vmem:[#allocation4 + $0xc0] sm:$0xff]
    %v616 = vld [vmem:[#allocation4 + $0xc8] sm:$0xff]
    %v617 = vld [vmem:[#allocation4 + $0xd0] sm:$0xff]
    %v618 = vld [vmem:[#allocation4 + $0xd8] sm:$0xff]
    %v619 = vld [vmem:[#allocation4 + $0xe0] sm:$0xff]
    %v620 = vld [vmem:[#allocation4 + $0xe8] sm:$0xff]
    %v621 = vld [vmem:[#allocation4 + $0xf0] sm:$0xff]
    %v622 = vld [vmem:[#allocation4 + $0xf8] sm:$0xff]
    %v623 = vld [vmem:[#allocation4 + $0x100] sm:$0xff]
    %v624 = vld [vmem:[#allocation4 + $0x108] sm:$0xff]
    %v625 = vld [vmem:[#allocation4 + $0x110] sm:$0xff]
    %v626 = vld [vmem:[#allocation4 + $0x118] sm:$0xff]
    %v627 = vld [vmem:[#allocation4 + $0x120] sm:$0xff]
    %v628 = vld [vmem:[#allocation4 + $0x128] sm:$0xff]
    %v629 = vld [vmem:[#allocation4 + $0x130] sm:$0xff]
    %v630 = vld [vmem:[#allocation4 + $0x138] sm:$0xff]
    %v631 = vld [vmem:[#allocation4 + $0x140] sm:$0xff]
    %v632 = vld [vmem:[#allocation4 + $0x148] sm:$0xff]
    %v633 = vld [vmem:[#allocation4 + $0x150] sm:$0xff]
    %v634 = vld [vmem:[#allocation4 + $0x158] sm:$0xff]
    %v635 = vld [vmem:[#allocation4 + $0x160] sm:$0xff]
    %v636 = vld [vmem:[#allocation4 + $0x168] sm:$0xff]
    %v637 = vld [vmem:[#allocation4 + $0x170] sm:$0xff]
    %v638 = vld [vmem:[#allocation4 + $0x178] sm:$0xff]
    %v639 = vld [vmem:[#allocation4 + $0x180] sm:$0xff]
    %v640 = vld [vmem:[#allocation4 + $0x188] sm:$0xff]
    %v641 = vld [vmem:[#allocation4 + $0x190] sm:$0xff]
    %v642 = vld [vmem:[#allocation4 + $0x198] sm:$0xff]
    %v643 = vld [vmem:[#allocation4 + $0x1a0] sm:$0xff]
    %v644 = vld [vmem:[#allocation4 + $0x1a8] sm:$0xff]
    %v645 = vld [vmem:[#allocation4 + $0x1b0] sm:$0xff]
    %v646 = vld [vmem:[#allocation4 + $0x1b8] sm:$0xff]
    %v647 = vld [vmem:[#allocation4 + $0x1c0] sm:$0xff]
    %v648 = vld [vmem:[#allocation4 + $0x1c8] sm:$0xff]
    %v649 = vld [vmem:[#allocation4 + $0x1d0] sm:$0xff]
    %v650 = vld [vmem:[#allocation4 + $0x1d8] sm:$0xff]
    %v651 = vld [vmem:[#allocation4 + $0x1e0] sm:$0xff]
    %v652 = vld [vmem:[#allocation4 + $0x1e8] sm:$0xff]
    %v653 = vld [vmem:[#allocation4 + $0x1f0] sm:$0xff]
    %v654 = vld [vmem:[#allocation4 + $0x1f8] sm:$0xff]
    %655 = vmatpush.msra.mxu0 %v651
    %656 = vmatpush.msra.mxu0 %v647
    %657 = vmatpush.msra.mxu0 %v643
    %658 = vmatpush.msra.mxu0 %v639
    %659 = vmatpush.msra.mxu0 %v635
    %660 = vmatpush.msra.mxu0 %v631
    %661 = vmatpush.msra.mxu0 %v627
    %662 = vmatpush.msra.mxu0 %v623
    %663 = vmatpush.msra.mxu0 %v619
    %664 = vmatpush.msra.mxu0 %v615
    %665 = vmatpush.msra.mxu0 %v611
    %666 = vmatpush.msra.mxu0 %v607
    %667 = vmatpush.msra.mxu0 %v603
    %668 = vmatpush.msra.mxu0 %v599
    %669 = vmatpush.msra.mxu0 %v595
    %670 = vmatpush.msra.mxu0 %v591
    %671 = vmatmul.f32.gmra.mxu0 %v587
    %v672 = vpop.f32.mrf.mxu0
    %v673 = vadd.f32 0.0, %v672
    %674 = vdwg.mxu0
    %675 = vmatpush.msra.mxu0 %v652
    %676 = vmatpush.msra.mxu0 %v648
    %677 = vmatpush.msra.mxu0 %v644
    %678 = vmatpush.msra.mxu0 %v640
    %679 = vmatpush.msra.mxu0 %v636
    %680 = vmatpush.msra.mxu0 %v632
    %681 = vmatpush.msra.mxu0 %v628
    %682 = vmatpush.msra.mxu0 %v624
    %683 = vmatpush.msra.mxu0 %v620
    %684 = vmatpush.msra.mxu0 %v616
    %685 = vmatpush.msra.mxu0 %v612
    %686 = vmatpush.msra.mxu0 %v608
    %687 = vmatpush.msra.mxu0 %v604
    %688 = vmatpush.msra.mxu0 %v600
    %689 = vmatpush.msra.mxu0 %v596
    %690 = vmatpush.msra.mxu0 %v592
    %691 = vmatmul.f32.gmra.mxu0 %v587
    %v692 = vpop.f32.mrf.mxu0
    %v693 = vadd.f32 0.0, %v692
    %694 = vdwg.mxu0
    %695 = vmatpush.msra.mxu0 %v653
    %696 = vmatpush.msra.mxu0 %v649
    %697 = vmatpush.msra.mxu0 %v645
    %698 = vmatpush.msra.mxu0 %v641
    %699 = vmatpush.msra.mxu0 %v637
    %700 = vmatpush.msra.mxu0 %v633
    %701 = vmatpush.msra.mxu0 %v629
    %702 = vmatpush.msra.mxu0 %v625
    %703 = vmatpush.msra.mxu0 %v621
    %704 = vmatpush.msra.mxu0 %v617
    %705 = vmatpush.msra.mxu0 %v613
    %706 = vmatpush.msra.mxu0 %v609
    %707 = vmatpush.msra.mxu0 %v605
    %708 = vmatpush.msra.mxu0 %v601
    %709 = vmatpush.msra.mxu0 %v597
    %710 = vmatpush.msra.mxu0 %v593
    %711 = vmatmul.f32.gmra.mxu0 %v587
    %v712 = vpop.f32.mrf.mxu0
    %v713 = vadd.f32 0.0, %v712
    %714 = vdwg.mxu0
    %715 = vmatpush.msra.mxu0 %v654
    %716 = vmatpush.msra.mxu0 %v650
    %717 = vmatpush.msra.mxu0 %v646
    %718 = vmatpush.msra.mxu0 %v642
    %719 = vmatpush.msra.mxu0 %v638
    %720 = vmatpush.msra.mxu0 %v634
    %721 = vmatpush.msra.mxu0 %v630
    %722 = vmatpush.msra.mxu0 %v626
    %723 = vmatpush.msra.mxu0 %v622
    %724 = vmatpush.msra.mxu0 %v618
    %725 = vmatpush.msra.mxu0 %v614
    %726 = vmatpush.msra.mxu0 %v610
    %727 = vmatpush.msra.mxu0 %v606
    %728 = vmatpush.msra.mxu0 %v602
    %729 = vmatpush.msra.mxu0 %v598
    %730 = vmatpush.msra.mxu0 %v594
    %731 = vmatmul.f32.gmra.mxu0 %v587
    %v732 = vpop.f32.mrf.mxu0
    %v733 = vadd.f32 0.0, %v732
    %734 = vdwg.mxu0
    %v739 = vrot.slane %v693, 6
    %v740 = vrot.slane %v713, 4
    %v741 = vrot.slane %v733, 2
    %v742 = vsel %vm187, %v673, %v739
    %v743 = vsel %vm189, %v740, %v741
    %v744 = vsel %vm191, %v742, %v743
    %v746 = vadd.f32 %v590, %v744
    %v747 = vmul.f32 %v746, 0.5
    %v748 = vtanh.pop %v747
    %v749 = vmul.f32 %v748, 0.5
    %v750 = vadd.f32 %v749, 0.5
    %v752 = vrot.slane %v746, 2
    %v754 = vmul.f32 %v752, 0.5
    %v755 = vtanh.pop %v754
    %v756 = vmul.f32 %v755, 0.5
    %v757 = vadd.f32 %v756, 0.5
    %v758 = vrot.slane %v746, 4
    %v760 = vtanh.pop %v758
    %v761 = vrot.slane %v746, 6
    %v763 = vmul.f32 %v761, 0.5
    %v764 = vtanh.pop %v763
    %v765 = vmul.f32 %v764, 0.5
    %v766 = vadd.f32 %v765, 0.5
    %v767 = vmul.f32 %v757, %v585
    %v768 = vmul.f32 %v750, %v760
    %v769 = vadd.f32 %v767, %v768
    %v770 = vtanh.pop %v769
    %v771 = vmul.f32 %v766, %v770
    %772 = vst [vmem:[#allocation2 + $0x6] sm:$0x3] %v771
    %s773 = scalar_lea.vmem %s0, 32
    %v774 = vld [vmem:[%s773] sm:$0xff]
    %v775 = vld [vmem:[#allocation4] sm:$0xff]
    %v776 = vld [vmem:[#allocation4 + $0x8] sm:$0xff]
    %v777 = vld [vmem:[#allocation4 + $0x10] sm:$0xff]
    %v778 = vld [vmem:[#allocation4 + $0x18] sm:$0xff]
    %v779 = vld [vmem:[#allocation4 + $0x20] sm:$0xff]
    %v780 = vld [vmem:[#allocation4 + $0x28] sm:$0xff]
    %v781 = vld [vmem:[#allocation4 + $0x30] sm:$0xff]
    %v782 = vld [vmem:[#allocation4 + $0x38] sm:$0xff]
    %v783 = vld [vmem:[#allocation4 + $0x40] sm:$0xff]
    %v784 = vld [vmem:[#allocation4 + $0x48] sm:$0xff]
    %v785 = vld [vmem:[#allocation4 + $0x50] sm:$0xff]
    %v786 = vld [vmem:[#allocation4 + $0x58] sm:$0xff]
    %v787 = vld [vmem:[#allocation4 + $0x60] sm:$0xff]
    %v788 = vld [vmem:[#allocation4 + $0x68] sm:$0xff]
    %v789 = vld [vmem:[#allocation4 + $0x70] sm:$0xff]
    %v790 = vld [vmem:[#allocation4 + $0x78] sm:$0xff]
    %v791 = vld [vmem:[#allocation4 + $0x80] sm:$0xff]
    %v792 = vld [vmem:[#allocation4 + $0x88] sm:$0xff]
    %v793 = vld [vmem:[#allocation4 + $0x90] sm:$0xff]
    %v794 = vld [vmem:[#allocation4 + $0x98] sm:$0xff]
    %v795 = vld [vmem:[#allocation4 + $0xa0] sm:$0xff]
    %v796 = vld [vmem:[#allocation4 + $0xa8] sm:$0xff]
    %v797 = vld [vmem:[#allocation4 + $0xb0] sm:$0xff]
    %v798 = vld [vmem:[#allocation4 + $0xb8] sm:$0xff]
    %v799 = vld [vmem:[#allocation4 + $0xc0] sm:$0xff]
    %v800 = vld [vmem:[#allocation4 + $0xc8] sm:$0xff]
    %v801 = vld [vmem:[#allocation4 + $0xd0] sm:$0xff]
    %v802 = vld [vmem:[#allocation4 + $0xd8] sm:$0xff]
    %v803 = vld [vmem:[#allocation4 + $0xe0] sm:$0xff]
    %v804 = vld [vmem:[#allocation4 + $0xe8] sm:$0xff]
    %v805 = vld [vmem:[#allocation4 + $0xf0] sm:$0xff]
    %v806 = vld [vmem:[#allocation4 + $0xf8] sm:$0xff]
    %v807 = vld [vmem:[#allocation4 + $0x100] sm:$0xff]
    %v808 = vld [vmem:[#allocation4 + $0x108] sm:$0xff]
    %v809 = vld [vmem:[#allocation4 + $0x110] sm:$0xff]
    %v810 = vld [vmem:[#allocation4 + $0x118] sm:$0xff]
    %v811 = vld [vmem:[#allocation4 + $0x120] sm:$0xff]
    %v812 = vld [vmem:[#allocation4 + $0x128] sm:$0xff]
    %v813 = vld [vmem:[#allocation4 + $0x130] sm:$0xff]
    %v814 = vld [vmem:[#allocation4 + $0x138] sm:$0xff]
    %v815 = vld [vmem:[#allocation4 + $0x140] sm:$0xff]
    %v816 = vld [vmem:[#allocation4 + $0x148] sm:$0xff]
    %v817 = vld [vmem:[#allocation4 + $0x150] sm:$0xff]
    %v818 = vld [vmem:[#allocation4 + $0x158] sm:$0xff]
    %v819 = vld [vmem:[#allocation4 + $0x160] sm:$0xff]
    %v820 = vld [vmem:[#allocation4 + $0x168] sm:$0xff]
    %v821 = vld [vmem:[#allocation4 + $0x170] sm:$0xff]
    %v822 = vld [vmem:[#allocation4 + $0x178] sm:$0xff]
    %v823 = vld [vmem:[#allocation4 + $0x180] sm:$0xff]
    %v824 = vld [vmem:[#allocation4 + $0x188] sm:$0xff]
    %v825 = vld [vmem:[#allocation4 + $0x190] sm:$0xff]
    %v826 = vld [vmem:[#allocation4 + $0x198] sm:$0xff]
    %v827 = vld [vmem:[#allocation4 + $0x1a0] sm:$0xff]
    %v828 = vld [vmem:[#allocation4 + $0x1a8] sm:$0xff]
    %v829 = vld [vmem:[#allocation4 + $0x1b0] sm:$0xff]
    %v830 = vld [vmem:[#allocation4 + $0x1b8] sm:$0xff]
    %v831 = vld [vmem:[#allocation4 + $0x1c0] sm:$0xff]
    %v832 = vld [vmem:[#allocation4 + $0x1c8] sm:$0xff]
    %v833 = vld [vmem:[#allocation4 + $0x1d0] sm:$0xff]
    %v834 = vld [vmem:[#allocation4 + $0x1d8] sm:$0xff]
    %v835 = vld [vmem:[#allocation4 + $0x1e0] sm:$0xff]
    %v836 = vld [vmem:[#allocation4 + $0x1e8] sm:$0xff]
    %v837 = vld [vmem:[#allocation4 + $0x1f0] sm:$0xff]
    %v838 = vld [vmem:[#allocation4 + $0x1f8] sm:$0xff]
    %839 = vmatpush.msra.mxu0 %v835
    %840 = vmatpush.msra.mxu0 %v831
    %841 = vmatpush.msra.mxu0 %v827
    %842 = vmatpush.msra.mxu0 %v823
    %843 = vmatpush.msra.mxu0 %v819
    %844 = vmatpush.msra.mxu0 %v815
    %845 = vmatpush.msra.mxu0 %v811
    %846 = vmatpush.msra.mxu0 %v807
    %847 = vmatpush.msra.mxu0 %v803
    %848 = vmatpush.msra.mxu0 %v799
    %849 = vmatpush.msra.mxu0 %v795
    %850 = vmatpush.msra.mxu0 %v791
    %851 = vmatpush.msra.mxu0 %v787
    %852 = vmatpush.msra.mxu0 %v783
    %853 = vmatpush.msra.mxu0 %v779
    %854 = vmatpush.msra.mxu0 %v775
    %855 = vmatmul.f32.gmra.mxu0 %v771
    %v856 = vpop.f32.mrf.mxu0
    %v857 = vadd.f32 0.0, %v856
    %858 = vdwg.mxu0
    %859 = vmatpush.msra.mxu0 %v836
    %860 = vmatpush.msra.mxu0 %v832
    %861 = vmatpush.msra.mxu0 %v828
    %862 = vmatpush.msra.mxu0 %v824
    %863 = vmatpush.msra.mxu0 %v820
    %864 = vmatpush.msra.mxu0 %v816
    %865 = vmatpush.msra.mxu0 %v812
    %866 = vmatpush.msra.mxu0 %v808
    %867 = vmatpush.msra.mxu0 %v804
    %868 = vmatpush.msra.mxu0 %v800
    %869 = vmatpush.msra.mxu0 %v796
    %870 = vmatpush.msra.mxu0 %v792
    %871 = vmatpush.msra.mxu0 %v788
    %872 = vmatpush.msra.mxu0 %v784
    %873 = vmatpush.msra.mxu0 %v780
    %874 = vmatpush.msra.mxu0 %v776
    %875 = vmatmul.f32.gmra.mxu0 %v771
    %v876 = vpop.f32.mrf.mxu0
    %v877 = vadd.f32 0.0, %v876
    %878 = vdwg.mxu0
    %879 = vmatpush.msra.mxu0 %v837
    %880 = vmatpush.msra.mxu0 %v833
    %881 = vmatpush.msra.mxu0 %v829
    %882 = vmatpush.msra.mxu0 %v825
    %883 = vmatpush.msra.mxu0 %v821
    %884 = vmatpush.msra.mxu0 %v817
    %885 = vmatpush.msra.mxu0 %v813
    %886 = vmatpush.msra.mxu0 %v809
    %887 = vmatpush.msra.mxu0 %v805
    %888 = vmatpush.msra.mxu0 %v801
    %889 = vmatpush.msra.mxu0 %v797
    %890 = vmatpush.msra.mxu0 %v793
    %891 = vmatpush.msra.mxu0 %v789
    %892 = vmatpush.msra.mxu0 %v785
    %893 = vmatpush.msra.mxu0 %v781
    %894 = vmatpush.msra.mxu0 %v777
    %895 = vmatmul.f32.gmra.mxu0 %v771
    %v896 = vpop.f32.mrf.mxu0
    %v897 = vadd.f32 0.0, %v896
    %898 = vdwg.mxu0
    %899 = vmatpush.msra.mxu0 %v838
    %900 = vmatpush.msra.mxu0 %v834
    %901 = vmatpush.msra.mxu0 %v830
    %902 = vmatpush.msra.mxu0 %v826
    %903 = vmatpush.msra.mxu0 %v822
    %904 = vmatpush.msra.mxu0 %v818
    %905 = vmatpush.msra.mxu0 %v814
    %906 = vmatpush.msra.mxu0 %v810
    %907 = vmatpush.msra.mxu0 %v806
    %908 = vmatpush.msra.mxu0 %v802
    %909 = vmatpush.msra.mxu0 %v798
    %910 = vmatpush.msra.mxu0 %v794
    %911 = vmatpush.msra.mxu0 %v790
    %912 = vmatpush.msra.mxu0 %v786
    %913 = vmatpush.msra.mxu0 %v782
    %914 = vmatpush.msra.mxu0 %v778
    %915 = vmatmul.f32.gmra.mxu0 %v771
    %v916 = vpop.f32.mrf.mxu0
    %v917 = vadd.f32 0.0, %v916
    %918 = vdwg.mxu0
    %v923 = vrot.slane %v877, 6
    %v924 = vrot.slane %v897, 4
    %v925 = vrot.slane %v917, 2
    %v926 = vsel %vm187, %v857, %v923
    %v927 = vsel %vm189, %v924, %v925
    %v928 = vsel %vm191, %v926, %v927
    %v930 = vadd.f32 %v774, %v928
    %v931 = vmul.f32 %v930, 0.5
    %v932 = vtanh.pop %v931
    %v933 = vmul.f32 %v932, 0.5
    %v934 = vadd.f32 %v933, 0.5
    %v936 = vrot.slane %v930, 2
    %v938 = vmul.f32 %v936, 0.5
    %v939 = vtanh.pop %v938
    %v940 = vmul.f32 %v939, 0.5
    %v941 = vadd.f32 %v940, 0.5
    %v942 = vrot.slane %v930, 4
    %v944 = vtanh.pop %v942
    %v945 = vrot.slane %v930, 6
    %v947 = vmul.f32 %v945, 0.5
    %v948 = vtanh.pop %v947
    %v949 = vmul.f32 %v948, 0.5
    %v950 = vadd.f32 %v949, 0.5
    %v951 = vmul.f32 %v941, %v769
    %v952 = vmul.f32 %v934, %v944
    %v953 = vadd.f32 %v951, %v952
    %v954 = vtanh.pop %v953
    %v955 = vmul.f32 %v950, %v954
    %956 = vst [vmem:[#allocation2 + $0x8] sm:$0x3] %v955
    %s957 = scalar_lea.vmem %s0, 40
    %v958 = vld [vmem:[%s957] sm:$0xff]
    %v959 = vld [vmem:[#allocation4] sm:$0xff]
    %v960 = vld [vmem:[#allocation4 + $0x8] sm:$0xff]
    %v961 = vld [vmem:[#allocation4 + $0x10] sm:$0xff]
    %v962 = vld [vmem:[#allocation4 + $0x18] sm:$0xff]
    %v963 = vld [vmem:[#allocation4 + $0x20] sm:$0xff]
    %v964 = vld [vmem:[#allocation4 + $0x28] sm:$0xff]
    %v965 = vld [vmem:[#allocation4 + $0x30] sm:$0xff]
    %v966 = vld [vmem:[#allocation4 + $0x38] sm:$0xff]
    %v967 = vld [vmem:[#allocation4 + $0x40] sm:$0xff]
    %v968 = vld [vmem:[#allocation4 + $0x48] sm:$0xff]
    %v969 = vld [vmem:[#allocation4 + $0x50] sm:$0xff]
    %v970 = vld [vmem:[#allocation4 + $0x58] sm:$0xff]
    %v971 = vld [vmem:[#allocation4 + $0x60] sm:$0xff]
    %v972 = vld [vmem:[#allocation4 + $0x68] sm:$0xff]
    %v973 = vld [vmem:[#allocation4 + $0x70] sm:$0xff]
    %v974 = vld [vmem:[#allocation4 + $0x78] sm:$0xff]
    %v975 = vld [vmem:[#allocation4 + $0x80] sm:$0xff]
    %v976 = vld [vmem:[#allocation4 + $0x88] sm:$0xff]
    %v977 = vld [vmem:[#allocation4 + $0x90] sm:$0xff]
    %v978 = vld [vmem:[#allocation4 + $0x98] sm:$0xff]
    %v979 = vld [vmem:[#allocation4 + $0xa0] sm:$0xff]
    %v980 = vld [vmem:[#allocation4 + $0xa8] sm:$0xff]
    %v981 = vld [vmem:[#allocation4 + $0xb0] sm:$0xff]
    %v982 = vld [vmem:[#allocation4 + $0xb8] sm:$0xff]
    %v983 = vld [vmem:[#allocation4 + $0xc0] sm:$0xff]
    %v984 = vld [vmem:[#allocation4 + $0xc8] sm:$0xff]
    %v985 = vld [vmem:[#allocation4 + $0xd0] sm:$0xff]
    %v986 = vld [vmem:[#allocation4 + $0xd8] sm:$0xff]
    %v987 = vld [vmem:[#allocation4 + $0xe0] sm:$0xff]
    %v988 = vld [vmem:[#allocation4 + $0xe8] sm:$0xff]
    %v989 = vld [vmem:[#allocation4 + $0xf0] sm:$0xff]
    %v990 = vld [vmem:[#allocation4 + $0xf8] sm:$0xff]
    %v991 = vld [vmem:[#allocation4 + $0x100] sm:$0xff]
    %v992 = vld [vmem:[#allocation4 + $0x108] sm:$0xff]
    %v993 = vld [vmem:[#allocation4 + $0x110] sm:$0xff]
    %v994 = vld [vmem:[#allocation4 + $0x118] sm:$0xff]
    %v995 = vld [vmem:[#allocation4 + $0x120] sm:$0xff]
    %v996 = vld [vmem:[#allocation4 + $0x128] sm:$0xff]
    %v997 = vld [vmem:[#allocation4 + $0x130] sm:$0xff]
    %v998 = vld [vmem:[#allocation4 + $0x138] sm:$0xff]
    %v999 = vld [vmem:[#allocation4 + $0x140] sm:$0xff]
    %v1000 = vld [vmem:[#allocation4 + $0x148] sm:$0xff]
    %v1001 = vld [vmem:[#allocation4 + $0x150] sm:$0xff]
    %v1002 = vld [vmem:[#allocation4 + $0x158] sm:$0xff]
    %v1003 = vld [vmem:[#allocation4 + $0x160] sm:$0xff]
    %v1004 = vld [vmem:[#allocation4 + $0x168] sm:$0xff]
    %v1005 = vld [vmem:[#allocation4 + $0x170] sm:$0xff]
    %v1006 = vld [vmem:[#allocation4 + $0x178] sm:$0xff]
    %v1007 = vld [vmem:[#allocation4 + $0x180] sm:$0xff]
    %v1008 = vld [vmem:[#allocation4 + $0x188] sm:$0xff]
    %v1009 = vld [vmem:[#allocation4 + $0x190] sm:$0xff]
    %v1010 = vld [vmem:[#allocation4 + $0x198] sm:$0xff]
    %v1011 = vld [vmem:[#allocation4 + $0x1a0] sm:$0xff]
    %v1012 = vld [vmem:[#allocation4 + $0x1a8] sm:$0xff]
    %v1013 = vld [vmem:[#allocation4 + $0x1b0] sm:$0xff]
    %v1014 = vld [vmem:[#allocation4 + $0x1b8] sm:$0xff]
    %v1015 = vld [vmem:[#allocation4 + $0x1c0] sm:$0xff]
    %v1016 = vld [vmem:[#allocation4 + $0x1c8] sm:$0xff]
    %v1017 = vld [vmem:[#allocation4 + $0x1d0] sm:$0xff]
    %v1018 = vld [vmem:[#allocation4 + $0x1d8] sm:$0xff]
    %v1019 = vld [vmem:[#allocation4 + $0x1e0] sm:$0xff]
    %v1020 = vld [vmem:[#allocation4 + $0x1e8] sm:$0xff]
    %v1021 = vld [vmem:[#allocation4 + $0x1f0] sm:$0xff]
    %v1022 = vld [vmem:[#allocation4 + $0x1f8] sm:$0xff]
    %1023 = vmatpush.msra.mxu0 %v1019
    %1024 = vmatpush.msra.mxu0 %v1015
    %1025 = vmatpush.msra.mxu0 %v1011
    %1026 = vmatpush.msra.mxu0 %v1007
    %1027 = vmatpush.msra.mxu0 %v1003
    %1028 = vmatpush.msra.mxu0 %v999
    %1029 = vmatpush.msra.mxu0 %v995
    %1030 = vmatpush.msra.mxu0 %v991
    %1031 = vmatpush.msra.mxu0 %v987
    %1032 = vmatpush.msra.mxu0 %v983
    %1033 = vmatpush.msra.mxu0 %v979
    %1034 = vmatpush.msra.mxu0 %v975
    %1035 = vmatpush.msra.mxu0 %v971
    %1036 = vmatpush.msra.mxu0 %v967
    %1037 = vmatpush.msra.mxu0 %v963
    %1038 = vmatpush.msra.mxu0 %v959
    %1039 = vmatmul.f32.gmra.mxu0 %v955
    %v1040 = vpop.f32.mrf.mxu0
    %v1041 = vadd.f32 0.0, %v1040
    %1042 = vdwg.mxu0
    %1043 = vmatpush.msra.mxu0 %v1020
    %1044 = vmatpush.msra.mxu0 %v1016
    %1045 = vmatpush.msra.mxu0 %v1012
    %1046 = vmatpush.msra.mxu0 %v1008
    %1047 = vmatpush.msra.mxu0 %v1004
    %1048 = vmatpush.msra.mxu0 %v1000
    %1049 = vmatpush.msra.mxu0 %v996
    %1050 = vmatpush.msra.mxu0 %v992
    %1051 = vmatpush.msra.mxu0 %v988
    %1052 = vmatpush.msra.mxu0 %v984
    %1053 = vmatpush.msra.mxu0 %v980
    %1054 = vmatpush.msra.mxu0 %v976
    %1055 = vmatpush.msra.mxu0 %v972
    %1056 = vmatpush.msra.mxu0 %v968
    %1057 = vmatpush.msra.mxu0 %v964
    %1058 = vmatpush.msra.mxu0 %v960
    %1059 = vmatmul.f32.gmra.mxu0 %v955
    %v1060 = vpop.f32.mrf.mxu0
    %v1061 = vadd.f32 0.0, %v1060
    %1062 = vdwg.mxu0
    %1063 = vmatpush.msra.mxu0 %v1021
    %1064 = vmatpush.msra.mxu0 %v1017
    %1065 = vmatpush.msra.mxu0 %v1013
    %1066 = vmatpush.msra.mxu0 %v1009
    %1067 = vmatpush.msra.mxu0 %v1005
    %1068 = vmatpush.msra.mxu0 %v1001
    %1069 = vmatpush.msra.mxu0 %v997
    %1070 = vmatpush.msra.mxu0 %v993
    %1071 = vmatpush.msra.mxu0 %v989
    %1072 = vmatpush.msra.mxu0 %v985
    %1073 = vmatpush.msra.mxu0 %v981
    %1074 = vmatpush.msra.mxu0 %v977
    %1075 = vmatpush.msra.mxu0 %v973
    %1076 = vmatpush.msra.mxu0 %v969
    %1077 = vmatpush.msra.mxu0 %v965
    %1078 = vmatpush.msra.mxu0 %v961
    %1079 = vmatmul.f32.gmra.mxu0 %v955
    %v1080 = vpop.f32.mrf.mxu0
    %v1081 = vadd.f32 0.0, %v1080
    %1082 = vdwg.mxu0
    %1083 = vmatpush.msra.mxu0 %v1022
    %1084 = vmatpush.msra.mxu0 %v1018
    %1085 = vmatpush.msra.mxu0 %v1014
    %1086 = vmatpush.msra.mxu0 %v1010
    %1087 = vmatpush.msra.mxu0 %v1006
    %1088 = vmatpush.msra.mxu0 %v1002
    %1089 = vmatpush.msra.mxu0 %v998
    %1090 = vmatpush.msra.mxu0 %v994
    %1091 = vmatpush.msra.mxu0 %v990
    %1092 = vmatpush.msra.mxu0 %v986
    %1093 = vmatpush.msra.mxu0 %v982
    %1094 = vmatpush.msra.mxu0 %v978
    %1095 = vmatpush.msra.mxu0 %v974
    %1096 = vmatpush.msra.mxu0 %v970
    %1097 = vmatpush.msra.mxu0 %v966
    %1098 = vmatpush.msra.mxu0 %v962
    %1099 = vmatmul.f32.gmra.mxu0 %v955
    %v1100 = vpop.f32.mrf.mxu0
    %v1101 = vadd.f32 0.0, %v1100
    %1102 = vdwg.mxu0
    %v1107 = vrot.slane %v1061, 6
    %v1108 = vrot.slane %v1081, 4
    %v1109 = vrot.slane %v1101, 2
    %v1110 = vsel %vm187, %v1041, %v1107
    %v1111 = vsel %vm189, %v1108, %v1109
    %v1112 = vsel %vm191, %v1110, %v1111
    %v1114 = vadd.f32 %v958, %v1112
    %v1115 = vmul.f32 %v1114, 0.5
    %v1116 = vtanh.pop %v1115
    %v1117 = vmul.f32 %v1116, 0.5
    %v1118 = vadd.f32 %v1117, 0.5
    %v1120 = vrot.slane %v1114, 2
    %v1122 = vmul.f32 %v1120, 0.5
    %v1123 = vtanh.pop %v1122
    %v1124 = vmul.f32 %v1123, 0.5
    %v1125 = vadd.f32 %v1124, 0.5
    %v1126 = vrot.slane %v1114, 4
    %v1128 = vtanh.pop %v1126
    %v1129 = vrot.slane %v1114, 6
    %v1131 = vmul.f32 %v1129, 0.5
    %v1132 = vtanh.pop %v1131
    %v1133 = vmul.f32 %v1132, 0.5
    %v1134 = vadd.f32 %v1133, 0.5
    %v1135 = vmul.f32 %v1125, %v953
    %v1136 = vmul.f32 %v1118, %v1128
    %v1137 = vadd.f32 %v1135, %v1136
    %v1138 = vtanh.pop %v1137
    %v1139 = vmul.f32 %v1134, %v1138
    %1140 = vst [vmem:[#allocation2 + $0xa] sm:$0x3] %v1139
    %s1141 = scalar_lea.vmem %s0, 48
    %v1142 = vld [vmem:[%s1141] sm:$0xff]
    %v1143 = vld [vmem:[#allocation4] sm:$0xff]
    %v1144 = vld [vmem:[#allocation4 + $0x8] sm:$0xff]
    %v1145 = vld [vmem:[#allocation4 + $0x10] sm:$0xff]
    %v1146 = vld [vmem:[#allocation4 + $0x18] sm:$0xff]
    %v1147 = vld [vmem:[#allocation4 + $0x20] sm:$0xff]
    %v1148 = vld [vmem:[#allocation4 + $0x28] sm:$0xff]
    %v1149 = vld [vmem:[#allocation4 + $0x30] sm:$0xff]
    %v1150 = vld [vmem:[#allocation4 + $0x38] sm:$0xff]
    %v1151 = vld [vmem:[#allocation4 + $0x40] sm:$0xff]
    %v1152 = vld [vmem:[#allocation4 + $0x48] sm:$0xff]
    %v1153 = vld [vmem:[#allocation4 + $0x50] sm:$0xff]
    %v1154 = vld [vmem:[#allocation4 + $0x58] sm:$0xff]
    %v1155 = vld [vmem:[#allocation4 + $0x60] sm:$0xff]
    %v1156 = vld [vmem:[#allocation4 + $0x68] sm:$0xff]
    %v1157 = vld [vmem:[#allocation4 + $0x70] sm:$0xff]
    %v1158 = vld [vmem:[#allocation4 + $0x78] sm:$0xff]
    %v1159 = vld [vmem:[#allocation4 + $0x80] sm:$0xff]
    %v1160 = vld [vmem:[#allocation4 + $0x88] sm:$0xff]
    %v1161 = vld [vmem:[#allocation4 + $0x90] sm:$0xff]
    %v1162 = vld [vmem:[#allocation4 + $0x98] sm:$0xff]
    %v1163 = vld [vmem:[#allocation4 + $0xa0] sm:$0xff]
    %v1164 = vld [vmem:[#allocation4 + $0xa8] sm:$0xff]
    %v1165 = vld [vmem:[#allocation4 + $0xb0] sm:$0xff]
    %v1166 = vld [vmem:[#allocation4 + $0xb8] sm:$0xff]
    %v1167 = vld [vmem:[#allocation4 + $0xc0] sm:$0xff]
    %v1168 = vld [vmem:[#allocation4 + $0xc8] sm:$0xff]
    %v1169 = vld [vmem:[#allocation4 + $0xd0] sm:$0xff]
    %v1170 = vld [vmem:[#allocation4 + $0xd8] sm:$0xff]
    %v1171 = vld [vmem:[#allocation4 + $0xe0] sm:$0xff]
    %v1172 = vld [vmem:[#allocation4 + $0xe8] sm:$0xff]
    %v1173 = vld [vmem:[#allocation4 + $0xf0] sm:$0xff]
    %v1174 = vld [vmem:[#allocation4 + $0xf8] sm:$0xff]
    %v1175 = vld [vmem:[#allocation4 + $0x100] sm:$0xff]
    %v1176 = vld [vmem:[#allocation4 + $0x108] sm:$0xff]
    %v1177 = vld [vmem:[#allocation4 + $0x110] sm:$0xff]
    %v1178 = vld [vmem:[#allocation4 + $0x118] sm:$0xff]
    %v1179 = vld [vmem:[#allocation4 + $0x120] sm:$0xff]
    %v1180 = vld [vmem:[#allocation4 + $0x128] sm:$0xff]
    %v1181 = vld [vmem:[#allocation4 + $0x130] sm:$0xff]
    %v1182 = vld [vmem:[#allocation4 + $0x138] sm:$0xff]
    %v1183 = vld [vmem:[#allocation4 + $0x140] sm:$0xff]
    %v1184 = vld [vmem:[#allocation4 + $0x148] sm:$0xff]
    %v1185 = vld [vmem:[#allocation4 + $0x150] sm:$0xff]
    %v1186 = vld [vmem:[#allocation4 + $0x158] sm:$0xff]
    %v1187 = vld [vmem:[#allocation4 + $0x160] sm:$0xff]
    %v1188 = vld [vmem:[#allocation4 + $0x168] sm:$0xff]
    %v1189 = vld [vmem:[#allocation4 + $0x170] sm:$0xff]
    %v1190 = vld [vmem:[#allocation4 + $0x178] sm:$0xff]
    %v1191 = vld [vmem:[#allocation4 + $0x180] sm:$0xff]
    %v1192 = vld [vmem:[#allocation4 + $0x188] sm:$0xff]
    %v1193 = vld [vmem:[#allocation4 + $0x190] sm:$0xff]
    %v1194 = vld [vmem:[#allocation4 + $0x198] sm:$0xff]
    %v1195 = vld [vmem:[#allocation4 + $0x1a0] sm:$0xff]
    %v1196 = vld [vmem:[#allocation4 + $0x1a8] sm:$0xff]
    %v1197 = vld [vmem:[#allocation4 + $0x1b0] sm:$0xff]
    %v1198 = vld [vmem:[#allocation4 + $0x1b8] sm:$0xff]
    %v1199 = vld [vmem:[#allocation4 + $0x1c0] sm:$0xff]
    %v1200 = vld [vmem:[#allocation4 + $0x1c8] sm:$0xff]
    %v1201 = vld [vmem:[#allocation4 + $0x1d0] sm:$0xff]
    %v1202 = vld [vmem:[#allocation4 + $0x1d8] sm:$0xff]
    %v1203 = vld [vmem:[#allocation4 + $0x1e0] sm:$0xff]
    %v1204 = vld [vmem:[#allocation4 + $0x1e8] sm:$0xff]
    %v1205 = vld [vmem:[#allocation4 + $0x1f0] sm:$0xff]
    %v1206 = vld [vmem:[#allocation4 + $0x1f8] sm:$0xff]
    %1207 = vmatpush.msra.mxu0 %v1203
    %1208 = vmatpush.msra.mxu0 %v1199
    %1209 = vmatpush.msra.mxu0 %v1195
    %1210 = vmatpush.msra.mxu0 %v1191
    %1211 = vmatpush.msra.mxu0 %v1187
    %1212 = vmatpush.msra.mxu0 %v1183
    %1213 = vmatpush.msra.mxu0 %v1179
    %1214 = vmatpush.msra.mxu0 %v1175
    %1215 = vmatpush.msra.mxu0 %v1171
    %1216 = vmatpush.msra.mxu0 %v1167
    %1217 = vmatpush.msra.mxu0 %v1163
    %1218 = vmatpush.msra.mxu0 %v1159
    %1219 = vmatpush.msra.mxu0 %v1155
    %1220 = vmatpush.msra.mxu0 %v1151
    %1221 = vmatpush.msra.mxu0 %v1147
    %1222 = vmatpush.msra.mxu0 %v1143
    %1223 = vmatmul.f32.gmra.mxu0 %v1139
    %v1224 = vpop.f32.mrf.mxu0
    %v1225 = vadd.f32 0.0, %v1224
    %1226 = vdwg.mxu0
    %1227 = vmatpush.msra.mxu0 %v1204
    %1228 = vmatpush.msra.mxu0 %v1200
    %1229 = vmatpush.msra.mxu0 %v1196
    %1230 = vmatpush.msra.mxu0 %v1192
    %1231 = vmatpush.msra.mxu0 %v1188
    %1232 = vmatpush.msra.mxu0 %v1184
    %1233 = vmatpush.msra.mxu0 %v1180
    %1234 = vmatpush.msra.mxu0 %v1176
    %1235 = vmatpush.msra.mxu0 %v1172
    %1236 = vmatpush.msra.mxu0 %v1168
    %1237 = vmatpush.msra.mxu0 %v1164
    %1238 = vmatpush.msra.mxu0 %v1160
    %1239 = vmatpush.msra.mxu0 %v1156
    %1240 = vmatpush.msra.mxu0 %v1152
    %1241 = vmatpush.msra.mxu0 %v1148
    %1242 = vmatpush.msra.mxu0 %v1144
    %1243 = vmatmul.f32.gmra.mxu0 %v1139
    %v1244 = vpop.f32.mrf.mxu0
    %v1245 = vadd.f32 0.0, %v1244
    %1246 = vdwg.mxu0
    %1247 = vmatpush.msra.mxu0 %v1205
    %1248 = vmatpush.msra.mxu0 %v1201
    %1249 = vmatpush.msra.mxu0 %v1197
    %1250 = vmatpush.msra.mxu0 %v1193
    %1251 = vmatpush.msra.mxu0 %v1189
    %1252 = vmatpush.msra.mxu0 %v1185
    %1253 = vmatpush.msra.mxu0 %v1181
    %1254 = vmatpush.msra.mxu0 %v1177
    %1255 = vmatpush.msra.mxu0 %v1173
    %1256 = vmatpush.msra.mxu0 %v1169
    %1257 = vmatpush.msra.mxu0 %v1165
    %1258 = vmatpush.msra.mxu0 %v1161
    %1259 = vmatpush.msra.mxu0 %v1157
    %1260 = vmatpush.msra.mxu0 %v1153
    %1261 = vmatpush.msra.mxu0 %v1149
    %1262 = vmatpush.msra.mxu0 %v1145
    %1263 = vmatmul.f32.gmra.mxu0 %v1139
    %v1264 = vpop.f32.mrf.mxu0
    %v1265 = vadd.f32 0.0, %v1264
    %1266 = vdwg.mxu0
    %1267 = vmatpush.msra.mxu0 %v1206
    %1268 = vmatpush.msra.mxu0 %v1202
    %1269 = vmatpush.msra.mxu0 %v1198
    %1270 = vmatpush.msra.mxu0 %v1194
    %1271 = vmatpush.msra.mxu0 %v1190
    %1272 = vmatpush.msra.mxu0 %v1186
    %1273 = vmatpush.msra.mxu0 %v1182
    %1274 = vmatpush.msra.mxu0 %v1178
    %1275 = vmatpush.msra.mxu0 %v1174
    %1276 = vmatpush.msra.mxu0 %v1170
    %1277 = vmatpush.msra.mxu0 %v1166
    %1278 = vmatpush.msra.mxu0 %v1162
    %1279 = vmatpush.msra.mxu0 %v1158
    %1280 = vmatpush.msra.mxu0 %v1154
    %1281 = vmatpush.msra.mxu0 %v1150
    %1282 = vmatpush.msra.mxu0 %v1146
    %1283 = vmatmul.f32.gmra.mxu0 %v1139
    %v1284 = vpop.f32.mrf.mxu0
    %v1285 = vadd.f32 0.0, %v1284
    %1286 = vdwg.mxu0
    %v1291 = vrot.slane %v1245, 6
    %v1292 = vrot.slane %v1265, 4
    %v1293 = vrot.slane %v1285, 2
    %v1294 = vsel %vm187, %v1225, %v1291
    %v1295 = vsel %vm189, %v1292, %v1293
    %v1296 = vsel %vm191, %v1294, %v1295
    %v1298 = vadd.f32 %v1142, %v1296
    %v1299 = vmul.f32 %v1298, 0.5
    %v1300 = vtanh.pop %v1299
    %v1301 = vmul.f32 %v1300, 0.5
    %v1302 = vadd.f32 %v1301, 0.5
    %v1304 = vrot.slane %v1298, 2
    %v1306 = vmul.f32 %v1304, 0.5
    %v1307 = vtanh.pop %v1306
    %v1308 = vmul.f32 %v1307, 0.5
    %v1309 = vadd.f32 %v1308, 0.5
    %v1310 = vrot.slane %v1298, 4
    %v1312 = vtanh.pop %v1310
    %v1313 = vrot.slane %v1298, 6
    %v1315 = vmul.f32 %v1313, 0.5
    %v1316 = vtanh.pop %v1315
    %v1317 = vmul.f32 %v1316, 0.5
    %v1318 = vadd.f32 %v1317, 0.5
    %v1319 = vmul.f32 %v1309, %v1137
    %v1320 = vmul.f32 %v1302, %v1312
    %v1321 = vadd.f32 %v1319, %v1320
    %v1322 = vtanh.pop %v1321
    %v1323 = vmul.f32 %v1318, %v1322
    %1324 = vst [vmem:[#allocation2 + $0xc] sm:$0x3] %v1323
    %s1325 = scalar_lea.vmem %s0, 56
    %v1326 = vld [vmem:[%s1325] sm:$0xff]
    %v1327 = vld [vmem:[#allocation4] sm:$0xff]
    %v1328 = vld [vmem:[#allocation4 + $0x8] sm:$0xff]
    %v1329 = vld [vmem:[#allocation4 + $0x10] sm:$0xff]
    %v1330 = vld [vmem:[#allocation4 + $0x18] sm:$0xff]
    %v1331 = vld [vmem:[#allocation4 + $0x20] sm:$0xff]
    %v1332 = vld [vmem:[#allocation4 + $0x28] sm:$0xff]
    %v1333 = vld [vmem:[#allocation4 + $0x30] sm:$0xff]
    %v1334 = vld [vmem:[#allocation4 + $0x38] sm:$0xff]
    %v1335 = vld [vmem:[#allocation4 + $0x40] sm:$0xff]
    %v1336 = vld [vmem:[#allocation4 + $0x48] sm:$0xff]
    %v1337 = vld [vmem:[#allocation4 + $0x50] sm:$0xff]
    %v1338 = vld [vmem:[#allocation4 + $0x58] sm:$0xff]
    %v1339 = vld [vmem:[#allocation4 + $0x60] sm:$0xff]
    %v1340 = vld [vmem:[#allocation4 + $0x68] sm:$0xff]
    %v1341 = vld [vmem:[#allocation4 + $0x70] sm:$0xff]
    %v1342 = vld [vmem:[#allocation4 + $0x78] sm:$0xff]
    %v1343 = vld [vmem:[#allocation4 + $0x80] sm:$0xff]
    %v1344 = vld [vmem:[#allocation4 + $0x88] sm:$0xff]
    %v1345 = vld [vmem:[#allocation4 + $0x90] sm:$0xff]
    %v1346 = vld [vmem:[#allocation4 + $0x98] sm:$0xff]
    %v1347 = vld [vmem:[#allocation4 + $0xa0] sm:$0xff]
    %v1348 = vld [vmem:[#allocation4 + $0xa8] sm:$0xff]
    %v1349 = vld [vmem:[#allocation4 + $0xb0] sm:$0xff]
    %v1350 = vld [vmem:[#allocation4 + $0xb8] sm:$0xff]
    %v1351 = vld [vmem:[#allocation4 + $0xc0] sm:$0xff]
    %v1352 = vld [vmem:[#allocation4 + $0xc8] sm:$0xff]
    %v1353 = vld [vmem:[#allocation4 + $0xd0] sm:$0xff]
    %v1354 = vld [vmem:[#allocation4 + $0xd8] sm:$0xff]
    %v1355 = vld [vmem:[#allocation4 + $0xe0] sm:$0xff]
    %v1356 = vld [vmem:[#allocation4 + $0xe8] sm:$0xff]
    %v1357 = vld [vmem:[#allocation4 + $0xf0] sm:$0xff]
    %v1358 = vld [vmem:[#allocation4 + $0xf8] sm:$0xff]
    %v1359 = vld [vmem:[#allocation4 + $0x100] sm:$0xff]
    %v1360 = vld [vmem:[#allocation4 + $0x108] sm:$0xff]
    %v1361 = vld [vmem:[#allocation4 + $0x110] sm:$0xff]
    %v1362 = vld [vmem:[#allocation4 + $0x118] sm:$0xff]
    %v1363 = vld [vmem:[#allocation4 + $0x120] sm:$0xff]
    %v1364 = vld [vmem:[#allocation4 + $0x128] sm:$0xff]
    %v1365 = vld [vmem:[#allocation4 + $0x130] sm:$0xff]
    %v1366 = vld [vmem:[#allocation4 + $0x138] sm:$0xff]
    %v1367 = vld [vmem:[#allocation4 + $0x140] sm:$0xff]
    %v1368 = vld [vmem:[#allocation4 + $0x148] sm:$0xff]
    %v1369 = vld [vmem:[#allocation4 + $0x150] sm:$0xff]
    %v1370 = vld [vmem:[#allocation4 + $0x158] sm:$0xff]
    %v1371 = vld [vmem:[#allocation4 + $0x160] sm:$0xff]
    %v1372 = vld [vmem:[#allocation4 + $0x168] sm:$0xff]
    %v1373 = vld [vmem:[#allocation4 + $0x170] sm:$0xff]
    %v1374 = vld [vmem:[#allocation4 + $0x178] sm:$0xff]
    %v1375 = vld [vmem:[#allocation4 + $0x180] sm:$0xff]
    %v1376 = vld [vmem:[#allocation4 + $0x188] sm:$0xff]
    %v1377 = vld [vmem:[#allocation4 + $0x190] sm:$0xff]
    %v1378 = vld [vmem:[#allocation4 + $0x198] sm:$0xff]
    %v1379 = vld [vmem:[#allocation4 + $0x1a0] sm:$0xff]
    %v1380 = vld [vmem:[#allocation4 + $0x1a8] sm:$0xff]
    %v1381 = vld [vmem:[#allocation4 + $0x1b0] sm:$0xff]
    %v1382 = vld [vmem:[#allocation4 + $0x1b8] sm:$0xff]
    %v1383 = vld [vmem:[#allocation4 + $0x1c0] sm:$0xff]
    %v1384 = vld [vmem:[#allocation4 + $0x1c8] sm:$0xff]
    %v1385 = vld [vmem:[#allocation4 + $0x1d0] sm:$0xff]
    %v1386 = vld [vmem:[#allocation4 + $0x1d8] sm:$0xff]
    %v1387 = vld [vmem:[#allocation4 + $0x1e0] sm:$0xff]
    %v1388 = vld [vmem:[#allocation4 + $0x1e8] sm:$0xff]
    %v1389 = vld [vmem:[#allocation4 + $0x1f0] sm:$0xff]
    %v1390 = vld [vmem:[#allocation4 + $0x1f8] sm:$0xff]
    %1391 = vmatpush.msra.mxu0 %v1387
    %1392 = vmatpush.msra.mxu0 %v1383
    %1393 = vmatpush.msra.mxu0 %v1379
    %1394 = vmatpush.msra.mxu0 %v1375
    %1395 = vmatpush.msra.mxu0 %v1371
    %1396 = vmatpush.msra.mxu0 %v1367
    %1397 = vmatpush.msra.mxu0 %v1363
    %1398 = vmatpush.msra.mxu0 %v1359
    %1399 = vmatpush.msra.mxu0 %v1355
    %1400 = vmatpush.msra.mxu0 %v1351
    %1401 = vmatpush.msra.mxu0 %v1347
    %1402 = vmatpush.msra.mxu0 %v1343
    %1403 = vmatpush.msra.mxu0 %v1339
    %1404 = vmatpush.msra.mxu0 %v1335
    %1405 = vmatpush.msra.mxu0 %v1331
    %1406 = vmatpush.msra.mxu0 %v1327
    %1407 = vmatmul.f32.gmra.mxu0 %v1323
    %v1408 = vpop.f32.mrf.mxu0
    %v1409 = vadd.f32 0.0, %v1408
    %1410 = vdwg.mxu0
    %1411 = vmatpush.msra.mxu0 %v1388
    %1412 = vmatpush.msra.mxu0 %v1384
    %1413 = vmatpush.msra.mxu0 %v1380
    %1414 = vmatpush.msra.mxu0 %v1376
    %1415 = vmatpush.msra.mxu0 %v1372
    %1416 = vmatpush.msra.mxu0 %v1368
    %1417 = vmatpush.msra.mxu0 %v1364
    %1418 = vmatpush.msra.mxu0 %v1360
    %1419 = vmatpush.msra.mxu0 %v1356
    %1420 = vmatpush.msra.mxu0 %v1352
    %1421 = vmatpush.msra.mxu0 %v1348
    %1422 = vmatpush.msra.mxu0 %v1344
    %1423 = vmatpush.msra.mxu0 %v1340
    %1424 = vmatpush.msra.mxu0 %v1336
    %1425 = vmatpush.msra.mxu0 %v1332
    %1426 = vmatpush.msra.mxu0 %v1328
    %1427 = vmatmul.f32.gmra.mxu0 %v1323
    %v1428 = vpop.f32.mrf.mxu0
    %v1429 = vadd.f32 0.0, %v1428
    %1430 = vdwg.mxu0
    %1431 = vmatpush.msra.mxu0 %v1389
    %1432 = vmatpush.msra.mxu0 %v1385
    %1433 = vmatpush.msra.mxu0 %v1381
    %1434 = vmatpush.msra.mxu0 %v1377
    %1435 = vmatpush.msra.mxu0 %v1373
    %1436 = vmatpush.msra.mxu0 %v1369
    %1437 = vmatpush.msra.mxu0 %v1365
    %1438 = vmatpush.msra.mxu0 %v1361
    %1439 = vmatpush.msra.mxu0 %v1357
    %1440 = vmatpush.msra.mxu0 %v1353
    %1441 = vmatpush.msra.mxu0 %v1349
    %1442 = vmatpush.msra.mxu0 %v1345
    %1443 = vmatpush.msra.mxu0 %v1341
    %1444 = vmatpush.msra.mxu0 %v1337
    %1445 = vmatpush.msra.mxu0 %v1333
    %1446 = vmatpush.msra.mxu0 %v1329
    %1447 = vmatmul.f32.gmra.mxu0 %v1323
    %v1448 = vpop.f32.mrf.mxu0
    %v1449 = vadd.f32 0.0, %v1448
    %1450 = vdwg.mxu0
    %1451 = vmatpush.msra.mxu0 %v1390
    %1452 = vmatpush.msra.mxu0 %v1386
    %1453 = vmatpush.msra.mxu0 %v1382
    %1454 = vmatpush.msra.mxu0 %v1378
    %1455 = vmatpush.msra.mxu0 %v1374
    %1456 = vmatpush.msra.mxu0 %v1370
    %1457 = vmatpush.msra.mxu0 %v1366
    %1458 = vmatpush.msra.mxu0 %v1362
    %1459 = vmatpush.msra.mxu0 %v1358
    %1460 = vmatpush.msra.mxu0 %v1354
    %1461 = vmatpush.msra.mxu0 %v1350
    %1462 = vmatpush.msra.mxu0 %v1346
    %1463 = vmatpush.msra.mxu0 %v1342
    %1464 = vmatpush.msra.mxu0 %v1338
    %1465 = vmatpush.msra.mxu0 %v1334
    %1466 = vmatpush.msra.mxu0 %v1330
    %1467 = vmatmul.f32.gmra.mxu0 %v1323
    %v1468 = vpop.f32.mrf.mxu0
    %v1469 = vadd.f32 0.0, %v1468
    %1470 = vdwg.mxu0
    %v1475 = vrot.slane %v1429, 6
    %v1476 = vrot.slane %v1449, 4
    %v1477 = vrot.slane %v1469, 2
    %v1478 = vsel %vm187, %v1409, %v1475
    %v1479 = vsel %vm189, %v1476, %v1477
    %v1480 = vsel %vm191, %v1478, %v1479
    %v1482 = vadd.f32 %v1326, %v1480
    %v1483 = vmul.f32 %v1482, 0.5
    %v1484 = vtanh.pop %v1483
    %v1485 = vmul.f32 %v1484, 0.5
    %v1486 = vadd.f32 %v1485, 0.5
    %v1488 = vrot.slane %v1482, 2
    %v1490 = vmul.f32 %v1488, 0.5
    %v1491 = vtanh.pop %v1490
    %v1492 = vmul.f32 %v1491, 0.5
    %v1493 = vadd.f32 %v1492, 0.5
    %v1494 = vrot.slane %v1482, 4
    %v1496 = vtanh.pop %v1494
    %v1497 = vrot.slane %v1482, 6
    %v1499 = vmul.f32 %v1497, 0.5
    %v1500 = vtanh.pop %v1499
    %v1501 = vmul.f32 %v1500, 0.5
    %v1502 = vadd.f32 %v1501, 0.5
    %v1503 = vmul.f32 %v1493, %v1321
    %v1504 = vmul.f32 %v1486, %v1496
    %v1505 = vadd.f32 %v1503, %v1504
    %v1506 = vtanh.pop %v1505
    %v1507 = vmul.f32 %v1502, %v1506
    %1508 = vst [vmem:[#allocation2 + $0xe] sm:$0x3] %v1507
    %v1509 = vld [vmem:[#allocation2] sm:$0xff]
    %v1510 = vld [vmem:[#allocation2 + $0x8] sm:$0xff]
    %v1511 = vld [vmem:[%s2] sm:$0x1]
    %v1513 = vperm.slane %v1511, 0
    %v1515 = vmul.f32 %v1509, %v1513
    %v1516 = vmul.f32 %v1510, %v1513
    %1517 = vadd.xlane.f32.xlu0 %v1515
    %v1518 = vpop.xlane.xlu0 %1517
    %1519 = vadd.xlane.f32.xlu0 %v1516
    %v1520 = vpop.xlane.xlu0 %1519
    %v1521 = vld [vmem:[#allocation3] sm:$0x1]
    %v1523 = vperm.slane %v1521, 0
    %v1525 = vadd.f32 %v1518, %v1523
    %v1526 = vadd.f32 %v1520, %v1523
    %vm1527 = vcmask 7168
    %1528 = vst.msk [vmem:[%s4] sm:$0xff] %vm1527, %v1525
    %1529 = vst.msk [vmem:[%s4 + $0x8] sm:$0xff] %vm1527, %v1526
    // Predicated region
    $region22: #{air_model_forward.1} parent=1 // pred_check
      _
    $region23: #{air_model_forward.1} parent=1 // pred_check_branch
      %1531 = sbr.rel (0) target = $region25
    $region24: #{air_model_forward.1} parent=1 // pred_region
      _
    $region25: #{air_model_forward.1} parent=1 // pred_fallthru
      _
    // Predicated region
    $region26: #{air_model_forward.1} parent=1 // pred_check
      _
    $region27: #{air_model_forward.1} parent=1 // pred_check_branch
      %1533 = sbr.rel (0) target = $region29
    $region28: #{air_model_forward.1} parent=1 // pred_region
      _
    $region29: #{air_model_forward.1} parent=1 // pred_fallthru
      _
    %1534 = vsyncpa [#allocation5], 1

</llo_original>
